<compile_context>
chip_gen: v7x
topology: tpu7x:2x2x1
jax: 0.10.0
libtpu: 0.0.40
codegen_flags: <defaults>
</compile_context>

<pallas_src>
import jax
import jax.numpy as jnp
from jax.experimental import pallas as pl
from jax.experimental.pallas import tpu as pltpu


def lora_kernel(x_ref, w_ref, bias_ref, xa_ref, b_ref, o_ref):
    x = x_ref[...]                                   # (tm, K)  bf16
    w = w_ref[...]                                   # (tn, K)  bf16, streamed

    # Base linear path: x @ W.T (contract last dims; lowers to MXU matmul with
    # transpose_rhs -- no materialized (tn, K) transpose).
    base = jax.lax.dot_general(
        x, w,
        dimension_numbers=(((1,), (1,)), ((), ())),
        preferred_element_type=jnp.float32)          # (tm, tn) f32
    base = base + bias_ref[...].astype(jnp.float32)  # (1, tn) broadcast

    # LoRA path: xa @ B with xa precomputed in the wrapper; bf16 x bf16 on the
    # MXU, f32 accumulation.
    delta = jnp.dot(xa_ref[...], b_ref[...],
                    preferred_element_type=jnp.float32)  # (tm, tn) f32

    o_ref[...] = (base + delta).astype(o_ref.dtype)


def _is_dual_core_chip():
    """True on chips with 2 TensorCores sharing HBM (v7x)."""
    try:
        kind = jax.devices()[0].device_kind.lower()
        return "7" in kind
    except Exception:  # pragma: no cover - be conservative if query fails
        return False


def _vmem_bytes(tm, tn, d_in, rank):
    """Rough double-buffered VMEM footprint of one grid step (bf16 operands)."""
    w_bytes = 2 * tn * d_in * 2          # double-buffered W tile (dominant)
    x_bytes = 2 * tm * d_in * 2          # x tile
    out_bytes = 2 * tm * tn * 2          # output tile
    bias_bytes = 2 * 1 * max(tn, 128) * 4
    b_bytes = 2 * max(rank, 8) * tn * 2
    xa_bytes = 2 * max(tm, 8) * max(rank, 128) * 2   # padded to lane width
    return w_bytes + x_bytes + out_bytes + bias_bytes + b_bytes + xa_bytes


def _tile_candidates(d_out):
    """Lane-dense (multiple-of-128) tile widths that divide d_out, plus d_out."""
    cands = {d_out}
    t = 128
    while t <= d_out:
        if d_out % t == 0:
            cands.add(t)
        t += 128
    return sorted(cands, reverse=True)


def _pick_tm(M):
    # Small batches: keep x fully resident (one sublane-aligned block).
    if M <= 256:
        return M
    for tm in (256, 128, 64, 32, 16, 8):
        if M % tm == 0:
            return tm
    return M


def _pick_tn(d_out, d_in, tm, rank, dual_core, budget_bytes=24 << 20):
    cands = _tile_candidates(d_out)
    if dual_core:
        # Keep >= 2 output tiles so dimension_semantics=("parallel",...) can
        # actually shard d_out across both TensorCores.
        split = [c for c in cands if d_out // c >= 2]
        if split:
            cands = split
    for tn in cands:
        if _vmem_bytes(tm, tn, d_in, rank) <= budget_bytes:
            return tn
    return cands[-1]


def lora_forward(x, w, bias, a, b):
    """x: (M, d_in); w: (d_out, d_in) (PyTorch Linear layout, NOT transposed);
    bias: (d_out,); a: (d_in, rank); b: (rank, d_out)."""
    M, d_in = x.shape
    d_out = w.shape[0]
    rank = a.shape[1]

    tm = _pick_tm(M)
    tn = _pick_tn(d_out, d_in, tm, rank, _is_dual_core_chip())
    grid = (M // tm, d_out // tn)

    bias2d = bias.reshape(1, d_out)

    # Hoist the lane-sparse x @ A matmul out of the per-tile loop: compute the
    # tiny (M, rank) intermediate once, keep it in B's dtype (bf16) so the
    # in-kernel xa @ B matmul stays on the native MXU path.
    xa = jnp.dot(x, a, preferred_element_type=jnp.float32).astype(b.dtype)

    itm = lambda arr: jnp.dtype(arr.dtype).itemsize
    cost = pl.CostEstimate(
        flops=2 * M * d_out * d_in + 2 * M * rank * d_out,
        transcendentals=0,
        bytes_accessed=(x.size * itm(x) + w.size * itm(w) + bias.size * 4
                        + xa.size * itm(xa) + b.size * itm(b)
                        + M * d_out * itm(x)))

    vmem_need = _vmem_bytes(tm, tn, d_in, rank)
    vmem_limit = min(32 << 20, max(16 << 20, 2 * vmem_need))

    return pl.pallas_call(
        lora_kernel,
        out_shape=jax.ShapeDtypeStruct((M, d_out), x.dtype),
        grid=grid,
        in_specs=[
            pl.BlockSpec((tm, d_in), lambda i, j: (i, 0)),    # x tile
            pl.BlockSpec((tn, d_in), lambda i, j: (j, 0)),    # W: streamed over d_out
            pl.BlockSpec((1, tn), lambda i, j: (0, j)),       # bias tile
            pl.BlockSpec((tm, rank), lambda i, j: (i, 0)),    # xa (precomputed)
            pl.BlockSpec((rank, tn), lambda i, j: (0, j)),    # B tile
        ],
        out_specs=pl.BlockSpec((tm, tn), lambda i, j: (i, j)),
        compiler_params=pltpu.CompilerParams(
            dimension_semantics=("parallel", "parallel"),
            vmem_limit_bytes=vmem_limit),
        cost_estimate=cost,
    )(x, w, bias2d, xa, b)


if __name__ == "__main__":
    d_model = 768   # nn.Linear(768, 768)
    d_out = 768
    rank = 4
    batch = 8       # small batch; sublane-dense (PyTorch example used 1)

    key = jax.random.PRNGKey(0)
    kx, kw, kb, ka, kbm = jax.random.split(key, 5)

    # nn.Linear default init: U(-1/sqrt(fan_in), 1/sqrt(fan_in))
    bound = 1.0 / (d_model ** 0.5)
    w = jax.random.uniform(kw, (d_out, d_model), jnp.float32, -bound, bound)
    bias = jax.random.uniform(kb, (d_out,), jnp.float32, -bound, bound)
    a = jax.random.normal(ka, (d_model, rank), jnp.float32) * 0.01
    b = jax.random.normal(kbm, (rank, d_out), jnp.float32) * 0.01
    x = jax.random.normal(kx, (batch, d_model), jnp.float32)

    # bf16 storage for the streamed operands; kernel accumulates in f32.
    x_bf = x.astype(jnp.bfloat16)
    w_bf = w.astype(jnp.bfloat16)
    a_bf = a.astype(jnp.bfloat16)
    b_bf = b.astype(jnp.bfloat16)

    out = lora_forward(x_bf, w_bf, bias, a_bf, b_bf)
    out = jax.block_until_ready(out)

    # Pure-JAX reference from the same bf16-rounded inputs, computed in f32.
    xf = x_bf.astype(jnp.float32)
    wf = w_bf.astype(jnp.float32)
    af = a_bf.astype(jnp.float32)
    bf_ = b_bf.astype(jnp.float32)
    ref = xf @ wf.T + bias + xf @ (af @ bf_)

    assert out.shape == (batch, d_out)
    assert jnp.allclose(out.astype(jnp.float32), ref, atol=5e-2, rtol=5e-2), \
        "mismatch vs reference"

    print("KERNEL_OK")
</pallas_src>

<mosaic_0001>
module attributes {stable_mosaic.version = 11 : i64} {
  func.func @lora_kernel(%arg0: i32, %arg1: i32, %arg2: memref<8x768xbf16, #tpu.memory_space<vmem>>, %arg3: memref<768x768xbf16, #tpu.memory_space<vmem>>, %arg4: memref<1x768xf32, #tpu.memory_space<vmem>>, %arg5: memref<8x4xbf16, #tpu.memory_space<vmem>>, %arg6: memref<4x768xbf16, #tpu.memory_space<vmem>>, %arg7: memref<8x768xbf16, #tpu.memory_space<vmem>>) attributes {dimension_semantics = [#tpu.dimension_semantics<parallel>, #tpu.dimension_semantics<parallel>], iteration_bounds = array<i64: 1, 1>, scalar_prefetch = 0 : i64, scratch_operands = 0 : i64, tpu.core_type = #tpu.core_type<tc>, window_params = [{transform_indices = @transform_0, window_bounds = array<i64: 8, 768>}, {transform_indices = @transform_1, window_bounds = array<i64: 768, 768>}, {transform_indices = @transform_2, window_bounds = array<i64: 1, 768>}, {transform_indices = @transform_3, window_bounds = array<i64: 8, 4>}, {transform_indices = @transform_4, window_bounds = array<i64: 4, 768>}, {transform_indices = @transform_5, window_bounds = array<i64: 8, 768>}]} {
    %c0 = arith.constant 0 : index
    %c0_0 = arith.constant 0 : index
    %0 = vector.load %arg2[%c0, %c0_0] : memref<8x768xbf16, #tpu.memory_space<vmem>>, vector<8x768xbf16>
    %c0_1 = arith.constant 0 : index
    %c0_2 = arith.constant 0 : index
    %1 = vector.load %arg3[%c0_1, %c0_2] : memref<768x768xbf16, #tpu.memory_space<vmem>>, vector<768x768xbf16>
    %cst = arith.constant dense<0.000000e+00> : vector<8x768xf32>
    %2 = tpu.matmul %0, %1, %cst {dimension_numbers = #tpu.dot_dimension_numbers<[1], [1], [0], [0], [0, 0, 1, 0], [], []>} : vector<8x768xbf16>, vector<768x768xbf16>, vector<8x768xf32> -> vector<8x768xf32>
    %c0_3 = arith.constant 0 : index
    %c0_4 = arith.constant 0 : index
    %3 = vector.load %arg4[%c0_3, %c0_4] : memref<1x768xf32, #tpu.memory_space<vmem>>, vector<1x768xf32>
    %4 = vector.broadcast %3 : vector<1x768xf32> to vector<8x768xf32>
    %5 = arith.addf %2, %4 : vector<8x768xf32>
    %c0_5 = arith.constant 0 : index
    %c0_6 = arith.constant 0 : index
    %6 = vector.load %arg5[%c0_5, %c0_6] : memref<8x4xbf16, #tpu.memory_space<vmem>>, vector<8x4xbf16>
    %c0_7 = arith.constant 0 : index
    %c0_8 = arith.constant 0 : index
    %7 = vector.load %arg6[%c0_7, %c0_8] : memref<4x768xbf16, #tpu.memory_space<vmem>>, vector<4x768xbf16>
    %cst_9 = arith.constant dense<0.000000e+00> : vector<8x768xf32>
    %8 = tpu.matmul %6, %7, %cst_9 {dimension_numbers = #tpu.dot_dimension_numbers<[1], [0], [0], [1], [0, 0, 1, 1], [], []>} : vector<8x4xbf16>, vector<4x768xbf16>, vector<8x768xf32> -> vector<8x768xf32>
    %9 = arith.addf %5, %8 : vector<8x768xf32>
    %10 = arith.truncf %9 : vector<8x768xf32> to vector<8x768xbf16>
    %c0_10 = arith.constant 0 : index
    %c0_11 = arith.constant 0 : index
    %11 = vector.load %arg7[%c0_10, %c0_11] : memref<8x768xbf16, #tpu.memory_space<vmem>>, vector<8x768xbf16>
    tpu.vector_store %arg7[%c0_10, %c0_11], %10 {strides = array<i32>} : memref<8x768xbf16, #tpu.memory_space<vmem>>, vector<8x768xbf16>,
    return
  }
  func.func @transform_0(%arg0: i32, %arg1: i32) -> (i32, i32) {
    %c0_i32 = arith.constant 0 : i32
    %c0_i32_0 = arith.constant 0 : i32
    return %arg0, %c0_i32 : i32, i32
  }
  func.func @transform_1(%arg0: i32, %arg1: i32) -> (i32, i32) {
    %c0_i32 = arith.constant 0 : i32
    %c0_i32_0 = arith.constant 0 : i32
    return %arg1, %c0_i32 : i32, i32
  }
  func.func @transform_2(%arg0: i32, %arg1: i32) -> (i32, i32) {
    %c0_i32 = arith.constant 0 : i32
    %c0_i32_0 = arith.constant 0 : i32
    return %c0_i32, %arg1 : i32, i32
  }
  func.func @transform_3(%arg0: i32, %arg1: i32) -> (i32, i32) {
    %c0_i32 = arith.constant 0 : i32
    %c0_i32_0 = arith.constant 0 : i32
    return %arg0, %c0_i32 : i32, i32
  }
  func.func @transform_4(%arg0: i32, %arg1: i32) -> (i32, i32) {
    %c0_i32 = arith.constant 0 : i32
    %c0_i32_0 = arith.constant 0 : i32
    return %c0_i32, %arg1 : i32, i32
  }
  func.func @transform_5(%arg0: i32, %arg1: i32) -> (i32, i32) {
    %c0_i32 = arith.constant 0 : i32
    return %arg0, %arg1 : i32, i32
  }
}

</mosaic_0001>

<llo_original>
// kernel: tpu_custom_call.1
$region0: #{tpu_custom_call.1}
  #allocation0 [shape = 'u32[]', space=smem, size = 0x4, offset = 0x4, fixed_abs, tag = 'smem constant byte address 0x4 - core index']
  #allocation1 [shape = 'u32[144,128]{1,0:T(1,128)}', space=vmem, size = 0x12000, scoped, tag = 'internal scratch']
  %s0 = inlined_call_operand.hbm [shape: bf16[8,768], index: 0, kind: input, shape index: {}]
  %s1 = inlined_call_operand.hbm [shape: bf16[768,768], index: 1, kind: input, shape index: {}]
  %s2 = inlined_call_operand.hbm [shape: f32[1,768], index: 2, kind: input, shape index: {}]
  %s3 = inlined_call_operand.vmem [shape: bf16[8,4], index: 3, kind: input, shape index: {}]
  %s4 = inlined_call_operand.hbm [shape: bf16[4,768], index: 4, kind: input, shape index: {}]
  %s5 = inlined_call_operand.hbm [shape: bf16[8,768], index: 5, kind: output, shape index: {}]
  %s6 = sld [smem:[#allocation0]]
  $region46: #{tpu_custom_call.1} parent=0
    _
  %s8 = ssub.s32 1, %s6
  %s9 = scalar_select 0, %s8, %s6
  $region1: #{tpu_custom_call.1} parent=0
    #allocation2 [shape = 'u8[12288]{0}', space=vmem, size = 0x3000, scoped, tag = 'input window, operand 0, single buffered']
    #allocation3 [shape = 's32[1]{0}', space=sflag, size = 0x4, scoped, tag = 'scoped memory for tpu_custom_call.1']
    #allocation4 [shape = 's32[1]{0}', space=sflag, size = 0x4, scoped, tag = 'scoped memory for tpu_custom_call.1']
    #allocation5 [shape = 'u8[1179648]{0}', space=vmem, size = 0x120000, scoped, tag = 'input window, operand 1, single buffered']
    #allocation6 [shape = 's32[1]{0}', space=sflag, size = 0x4, scoped, tag = 'scoped memory for tpu_custom_call.1']
    #allocation7 [shape = 'u8[3072]{0}', space=vmem, size = 0xc00, scoped, tag = 'input window, operand 2, single buffered']
    #allocation8 [shape = 'u8[6144]{0}', space=vmem, size = 0x1800, scoped, tag = 'input window, operand 4, single buffered']
    #allocation9 [shape = 's32[1]{0}', space=sflag, size = 0x4, scoped, tag = 'scoped memory for tpu_custom_call.1']
    #allocation10 [shape = 'u8[12288]{0}', space=vmem, size = 0x3000, scoped, tag = 'output window, operand 0, single buffered']
    %10 = vsyncpa [#allocation3], 0
    %11 = vsyncpa [#allocation6], 0
    %12 = vsyncpa [#allocation9], 0
    %13 = vsyncpa [#allocation4], 0
    // Predicated region
    $region2: #{tpu_custom_call.1} parent=1 // pred_check
      _
    $region3: #{tpu_custom_call.1} parent=1 // pred_check_branch
      %15 = sbr.rel (0) target = $region5
    $region4: #{tpu_custom_call.1} parent=1 // pred_region
      %s17 = ssub.s32 384, 384
      %18 = vsyncadd [#allocation3], %s17
      %s20 = sshll.u32 [#allocation2], 4
      %s21 = int_to_ptr.vmem [resolvable:$true] %s20
      %23 = dma.hbm_to_vmem [thread:$0]  %s0, 384, %s21, [#allocation3]
    $region5: #{tpu_custom_call.1} parent=1 // pred_fallthru
      _
    // Predicated region
    $region6: #{tpu_custom_call.1} parent=1 // pred_check
      _
    $region7: #{tpu_custom_call.1} parent=1 // pred_check_branch
      %25 = sbr.rel (0) target = $region9
    $region8: #{tpu_custom_call.1} parent=1 // pred_region
      %s27 = ssub.s32 36864, 36864
      %28 = vsyncadd [#allocation6], %s27
      %s29 = sshll.u32 [#allocation5], 4
      %s30 = int_to_ptr.vmem [resolvable:$true] %s29
      %35 = dma.hbm_to_vmem [thread:$0]  %s1, 36864, %s30, [#allocation6], 384, 384, 24
    $region9: #{tpu_custom_call.1} parent=1 // pred_fallthru
      _
    // Predicated region
    $region10: #{tpu_custom_call.1} parent=1 // pred_check
      _
    $region11: #{tpu_custom_call.1} parent=1 // pred_check_branch
      %37 = sbr.rel (0) target = $region13
    $region12: #{tpu_custom_call.1} parent=1 // pred_region
      %s39 = ssub.s32 96, 96
      %40 = vsyncadd [#allocation6], %s39
      %s42 = sshll.u32 [#allocation7], 4
      %s43 = int_to_ptr.vmem [resolvable:$true] %s42
      %45 = dma.hbm_to_vmem [thread:$0]  %s2, 96, %s43, [#allocation6]
    $region13: #{tpu_custom_call.1} parent=1 // pred_fallthru
      _
    // Predicated region
    $region14: #{tpu_custom_call.1} parent=1 // pred_check
      _
    $region15: #{tpu_custom_call.1} parent=1 // pred_check_branch
      %47 = sbr.rel (0) target = $region17
    $region16: #{tpu_custom_call.1} parent=1 // pred_region
      _
    $region17: #{tpu_custom_call.1} parent=1 // pred_fallthru
      _
    // Predicated region
    $region18: #{tpu_custom_call.1} parent=1 // pred_check
      _
    $region19: #{tpu_custom_call.1} parent=1 // pred_check_branch
      %49 = sbr.rel (0) target = $region21
    $region20: #{tpu_custom_call.1} parent=1 // pred_region
      %s51 = ssub.s32 192, 192
      %52 = vsyncadd [#allocation9], %s51
      %s54 = sshll.u32 [#allocation8], 4
      %s55 = int_to_ptr.vmem [resolvable:$true] %s54
      %57 = dma.hbm_to_vmem [thread:$0]  %s4, 192, %s55, [#allocation9]
    $region21: #{tpu_custom_call.1} parent=1 // pred_fallthru
      _
    // Predicated region
    $region22: #{tpu_custom_call.1} parent=1 // pred_check
      _
    $region23: #{tpu_custom_call.1} parent=1 // pred_check_branch
      %59 = sbr.rel (0) target = $region25
    $region24: #{tpu_custom_call.1} parent=1 // pred_region
      %60 = dma.done [#allocation3], 384
    $region25: #{tpu_custom_call.1} parent=1 // pred_fallthru
      _
    // Predicated region
    $region26: #{tpu_custom_call.1} parent=1 // pred_check
      _
    $region27: #{tpu_custom_call.1} parent=1 // pred_check_branch
      %62 = sbr.rel (0) target = $region29
    $region28: #{tpu_custom_call.1} parent=1 // pred_region
      %63 = dma.done [#allocation6], 36864
    $region29: #{tpu_custom_call.1} parent=1 // pred_fallthru
      _
    // Predicated region
    $region30: #{tpu_custom_call.1} parent=1 // pred_check
      _
    $region31: #{tpu_custom_call.1} parent=1 // pred_check_branch
      %65 = sbr.rel (0) target = $region33
    $region32: #{tpu_custom_call.1} parent=1 // pred_region
      %66 = dma.done [#allocation6], 96
    $region33: #{tpu_custom_call.1} parent=1 // pred_fallthru
      _
    // Predicated region
    $region34: #{tpu_custom_call.1} parent=1 // pred_check
      _
    $region35: #{tpu_custom_call.1} parent=1 // pred_check_branch
      %68 = sbr.rel (0) target = $region37
    $region36: #{tpu_custom_call.1} parent=1 // pred_region
      %69 = dma.done [#allocation9], 192
    $region37: #{tpu_custom_call.1} parent=1 // pred_fallthru
      _
    %v71 = vld [vmem:[#allocation2] sm:$0xff]
    %v72 = vld [vmem:[#allocation2 + $0x8] sm:$0xff]
    %v73 = vld [vmem:[#allocation2 + $0x10] sm:$0xff]
    %v74 = vld [vmem:[#allocation5] sm:$0xff]
    %v75 = vld [vmem:[#allocation5 + $0x8] sm:$0xff]
    %v76 = vld [vmem:[#allocation5 + $0x10] sm:$0xff]
    %v77 = vld [vmem:[#allocation5 + $0x18] sm:$0xff]
    %v78 = vld [vmem:[#allocation5 + $0x20] sm:$0xff]
    %v79 = vld [vmem:[#allocation5 + $0x28] sm:$0xff]
    %v80 = vld [vmem:[#allocation5 + $0x30] sm:$0xff]
    %v81 = vld [vmem:[#allocation5 + $0x38] sm:$0xff]
    %v82 = vld [vmem:[#allocation5 + $0x40] sm:$0xff]
    %v83 = vld [vmem:[#allocation5 + $0x48] sm:$0xff]
    %v84 = vld [vmem:[#allocation5 + $0x50] sm:$0xff]
    %v85 = vld [vmem:[#allocation5 + $0x58] sm:$0xff]
    %v86 = vld [vmem:[#allocation5 + $0x60] sm:$0xff]
    %v87 = vld [vmem:[#allocation5 + $0x68] sm:$0xff]
    %v88 = vld [vmem:[#allocation5 + $0x70] sm:$0xff]
    %v89 = vld [vmem:[#allocation5 + $0x78] sm:$0xff]
    %v90 = vld [vmem:[#allocation5 + $0x80] sm:$0xff]
    %v91 = vld [vmem:[#allocation5 + $0x88] sm:$0xff]
    %v92 = vld [vmem:[#allocation5 + $0x90] sm:$0xff]
    %v93 = vld [vmem:[#allocation5 + $0x98] sm:$0xff]
    %v94 = vld [vmem:[#allocation5 + $0xa0] sm:$0xff]
    %v95 = vld [vmem:[#allocation5 + $0xa8] sm:$0xff]
    %v96 = vld [vmem:[#allocation5 + $0xb0] sm:$0xff]
    %v97 = vld [vmem:[#allocation5 + $0xb8] sm:$0xff]
    %v98 = vld [vmem:[#allocation5 + $0xc0] sm:$0xff]
    %v99 = vld [vmem:[#allocation5 + $0xc8] sm:$0xff]
    %v100 = vld [vmem:[#allocation5 + $0xd0] sm:$0xff]
    %v101 = vld [vmem:[#allocation5 + $0xd8] sm:$0xff]
    %v102 = vld [vmem:[#allocation5 + $0xe0] sm:$0xff]
    %v103 = vld [vmem:[#allocation5 + $0xe8] sm:$0xff]
    %v104 = vld [vmem:[#allocation5 + $0xf0] sm:$0xff]
    %v105 = vld [vmem:[#allocation5 + $0xf8] sm:$0xff]
    %v106 = vld [vmem:[#allocation5 + $0x100] sm:$0xff]
    %v107 = vld [vmem:[#allocation5 + $0x108] sm:$0xff]
    %v108 = vld [vmem:[#allocation5 + $0x110] sm:$0xff]
    %v109 = vld [vmem:[#allocation5 + $0x118] sm:$0xff]
    %v110 = vld [vmem:[#allocation5 + $0x120] sm:$0xff]
    %v111 = vld [vmem:[#allocation5 + $0x128] sm:$0xff]
    %v112 = vld [vmem:[#allocation5 + $0x130] sm:$0xff]
    %v113 = vld [vmem:[#allocation5 + $0x138] sm:$0xff]
    %v114 = vld [vmem:[#allocation5 + $0x140] sm:$0xff]
    %v115 = vld [vmem:[#allocation5 + $0x148] sm:$0xff]
    %v116 = vld [vmem:[#allocation5 + $0x150] sm:$0xff]
    %v117 = vld [vmem:[#allocation5 + $0x158] sm:$0xff]
    %v118 = vld [vmem:[#allocation5 + $0x160] sm:$0xff]
    %v119 = vld [vmem:[#allocation5 + $0x168] sm:$0xff]
    %v120 = vld [vmem:[#allocation5 + $0x170] sm:$0xff]
    %v121 = vld [vmem:[#allocation5 + $0x178] sm:$0xff]
    %v122 = vld [vmem:[#allocation5 + $0x180] sm:$0xff]
    %v123 = vld [vmem:[#allocation5 + $0x188] sm:$0xff]
    %v124 = vld [vmem:[#allocation5 + $0x190] sm:$0xff]
    %v125 = vld [vmem:[#allocation5 + $0x198] sm:$0xff]
    %v126 = vld [vmem:[#allocation5 + $0x1a0] sm:$0xff]
    %v127 = vld [vmem:[#allocation5 + $0x1a8] sm:$0xff]
    %v128 = vld [vmem:[#allocation5 + $0x1b0] sm:$0xff]
    %v129 = vld [vmem:[#allocation5 + $0x1b8] sm:$0xff]
    %v130 = vld [vmem:[#allocation5 + $0x1c0] sm:$0xff]
    %v131 = vld [vmem:[#allocation5 + $0x1c8] sm:$0xff]
    %v132 = vld [vmem:[#allocation5 + $0x1d0] sm:$0xff]
    %v133 = vld [vmem:[#allocation5 + $0x1d8] sm:$0xff]
    %v134 = vld [vmem:[#allocation5 + $0x1e0] sm:$0xff]
    %v135 = vld [vmem:[#allocation5 + $0x1e8] sm:$0xff]
    %v136 = vld [vmem:[#allocation5 + $0x1f0] sm:$0xff]
    %v137 = vld [vmem:[#allocation5 + $0x1f8] sm:$0xff]
    %v138 = vld [vmem:[#allocation5 + $0x200] sm:$0xff]
    %v139 = vld [vmem:[#allocation5 + $0x208] sm:$0xff]
    %v140 = vld [vmem:[#allocation5 + $0x210] sm:$0xff]
    %v141 = vld [vmem:[#allocation5 + $0x218] sm:$0xff]
    %v142 = vld [vmem:[#allocation5 + $0x220] sm:$0xff]
    %v143 = vld [vmem:[#allocation5 + $0x228] sm:$0xff]
    %v144 = vld [vmem:[#allocation5 + $0x230] sm:$0xff]
    %v145 = vld [vmem:[#allocation5 + $0x238] sm:$0xff]
    %v146 = vld [vmem:[#allocation5 + $0x240] sm:$0xff]
    %v147 = vld [vmem:[#allocation5 + $0x248] sm:$0xff]
    %v148 = vld [vmem:[#allocation5 + $0x250] sm:$0xff]
    %v149 = vld [vmem:[#allocation5 + $0x258] sm:$0xff]
    %v150 = vld [vmem:[#allocation5 + $0x260] sm:$0xff]
    %v151 = vld [vmem:[#allocation5 + $0x268] sm:$0xff]
    %v152 = vld [vmem:[#allocation5 + $0x270] sm:$0xff]
    %v153 = vld [vmem:[#allocation5 + $0x278] sm:$0xff]
    %v154 = vld [vmem:[#allocation5 + $0x280] sm:$0xff]
    %v155 = vld [vmem:[#allocation5 + $0x288] sm:$0xff]
    %v156 = vld [vmem:[#allocation5 + $0x290] sm:$0xff]
    %v157 = vld [vmem:[#allocation5 + $0x298] sm:$0xff]
    %v158 = vld [vmem:[#allocation5 + $0x2a0] sm:$0xff]
    %v159 = vld [vmem:[#allocation5 + $0x2a8] sm:$0xff]
    %v160 = vld [vmem:[#allocation5 + $0x2b0] sm:$0xff]
    %v161 = vld [vmem:[#allocation5 + $0x2b8] sm:$0xff]
    %v162 = vld [vmem:[#allocation5 + $0x2c0] sm:$0xff]
    %v163 = vld [vmem:[#allocation5 + $0x2c8] sm:$0xff]
    %v164 = vld [vmem:[#allocation5 + $0x2d0] sm:$0xff]
    %v165 = vld [vmem:[#allocation5 + $0x2d8] sm:$0xff]
    %v166 = vld [vmem:[#allocation5 + $0x2e0] sm:$0xff]
    %v167 = vld [vmem:[#allocation5 + $0x2e8] sm:$0xff]
    %v168 = vld [vmem:[#allocation5 + $0x2f0] sm:$0xff]
    %v169 = vld [vmem:[#allocation5 + $0x2f8] sm:$0xff]
    %v170 = vld [vmem:[#allocation5 + $0x300] sm:$0xff]
    %v171 = vld [vmem:[#allocation5 + $0x308] sm:$0xff]
    %v172 = vld [vmem:[#allocation5 + $0x310] sm:$0xff]
    %v173 = vld [vmem:[#allocation5 + $0x318] sm:$0xff]
    %v174 = vld [vmem:[#allocation5 + $0x320] sm:$0xff]
    %v175 = vld [vmem:[#allocation5 + $0x328] sm:$0xff]
    %v176 = vld [vmem:[#allocation5 + $0x330] sm:$0xff]
    %v177 = vld [vmem:[#allocation5 + $0x338] sm:$0xff]
    %v178 = vld [vmem:[#allocation5 + $0x340] sm:$0xff]
    %v179 = vld [vmem:[#allocation5 + $0x348] sm:$0xff]
    %v180 = vld [vmem:[#allocation5 + $0x350] sm:$0xff]
    %v181 = vld [vmem:[#allocation5 + $0x358] sm:$0xff]
    %v182 = vld [vmem:[#allocation5 + $0x360] sm:$0xff]
    %v183 = vld [vmem:[#allocation5 + $0x368] sm:$0xff]
    %v184 = vld [vmem:[#allocation5 + $0x370] sm:$0xff]
    %v185 = vld [vmem:[#allocation5 + $0x378] sm:$0xff]
    %v186 = vld [vmem:[#allocation5 + $0x380] sm:$0xff]
    %v187 = vld [vmem:[#allocation5 + $0x388] sm:$0xff]
    %v188 = vld [vmem:[#allocation5 + $0x390] sm:$0xff]
    %v189 = vld [vmem:[#allocation5 + $0x398] sm:$0xff]
    %v190 = vld [vmem:[#allocation5 + $0x3a0] sm:$0xff]
    %v191 = vld [vmem:[#allocation5 + $0x3a8] sm:$0xff]
    %v192 = vld [vmem:[#allocation5 + $0x3b0] sm:$0xff]
    %v193 = vld [vmem:[#allocation5 + $0x3b8] sm:$0xff]
    %v194 = vld [vmem:[#allocation5 + $0x3c0] sm:$0xff]
    %v195 = vld [vmem:[#allocation5 + $0x3c8] sm:$0xff]
    %v196 = vld [vmem:[#allocation5 + $0x3d0] sm:$0xff]
    %v197 = vld [vmem:[#allocation5 + $0x3d8] sm:$0xff]
    %v198 = vld [vmem:[#allocation5 + $0x3e0] sm:$0xff]
    %v199 = vld [vmem:[#allocation5 + $0x3e8] sm:$0xff]
    %v200 = vld [vmem:[#allocation5 + $0x3f0] sm:$0xff]
    %v201 = vld [vmem:[#allocation5 + $0x3f8] sm:$0xff]
    %v202 = vld [vmem:[#allocation5 + $0x400] sm:$0xff]
    %v203 = vld [vmem:[#allocation5 + $0x408] sm:$0xff]
    %v204 = vld [vmem:[#allocation5 + $0x410] sm:$0xff]
    %v205 = vld [vmem:[#allocation5 + $0x418] sm:$0xff]
    %v206 = vld [vmem:[#allocation5 + $0x420] sm:$0xff]
    %v207 = vld [vmem:[#allocation5 + $0x428] sm:$0xff]
    %v208 = vld [vmem:[#allocation5 + $0x430] sm:$0xff]
    %v209 = vld [vmem:[#allocation5 + $0x438] sm:$0xff]
    %v210 = vld [vmem:[#allocation5 + $0x440] sm:$0xff]
    %v211 = vld [vmem:[#allocation5 + $0x448] sm:$0xff]
    %v212 = vld [vmem:[#allocation5 + $0x450] sm:$0xff]
    %v213 = vld [vmem:[#allocation5 + $0x458] sm:$0xff]
    %v214 = vld [vmem:[#allocation5 + $0x460] sm:$0xff]
    %v215 = vld [vmem:[#allocation5 + $0x468] sm:$0xff]
    %v216 = vld [vmem:[#allocation5 + $0x470] sm:$0xff]
    %v217 = vld [vmem:[#allocation5 + $0x478] sm:$0xff]
    %v218 = vld [vmem:[#allocation5 + $0x480] sm:$0xff]
    %v219 = vld [vmem:[#allocation5 + $0x488] sm:$0xff]
    %v220 = vld [vmem:[#allocation5 + $0x490] sm:$0xff]
    %v221 = vld [vmem:[#allocation5 + $0x498] sm:$0xff]
    %v222 = vld [vmem:[#allocation5 + $0x4a0] sm:$0xff]
    %v223 = vld [vmem:[#allocation5 + $0x4a8] sm:$0xff]
    %v224 = vld [vmem:[#allocation5 + $0x4b0] sm:$0xff]
    %v225 = vld [vmem:[#allocation5 + $0x4b8] sm:$0xff]
    %v226 = vld [vmem:[#allocation5 + $0x4c0] sm:$0xff]
    %v227 = vld [vmem:[#allocation5 + $0x4c8] sm:$0xff]
    %v228 = vld [vmem:[#allocation5 + $0x4d0] sm:$0xff]
    %v229 = vld [vmem:[#allocation5 + $0x4d8] sm:$0xff]
    %v230 = vld [vmem:[#allocation5 + $0x4e0] sm:$0xff]
    %v231 = vld [vmem:[#allocation5 + $0x4e8] sm:$0xff]
    %v232 = vld [vmem:[#allocation5 + $0x4f0] sm:$0xff]
    %v233 = vld [vmem:[#allocation5 + $0x4f8] sm:$0xff]
    %v234 = vld [vmem:[#allocation5 + $0x500] sm:$0xff]
    %v235 = vld [vmem:[#allocation5 + $0x508] sm:$0xff]
    %v236 = vld [vmem:[#allocation5 + $0x510] sm:$0xff]
    %v237 = vld [vmem:[#allocation5 + $0x518] sm:$0xff]
    %v238 = vld [vmem:[#allocation5 + $0x520] sm:$0xff]
    %v239 = vld [vmem:[#allocation5 + $0x528] sm:$0xff]
    %v240 = vld [vmem:[#allocation5 + $0x530] sm:$0xff]
    %v241 = vld [vmem:[#allocation5 + $0x538] sm:$0xff]
    %v242 = vld [vmem:[#allocation5 + $0x540] sm:$0xff]
    %v243 = vld [vmem:[#allocation5 + $0x548] sm:$0xff]
    %v244 = vld [vmem:[#allocation5 + $0x550] sm:$0xff]
    %v245 = vld [vmem:[#allocation5 + $0x558] sm:$0xff]
    %v246 = vld [vmem:[#allocation5 + $0x560] sm:$0xff]
    %v247 = vld [vmem:[#allocation5 + $0x568] sm:$0xff]
    %v248 = vld [vmem:[#allocation5 + $0x570] sm:$0xff]
    %v249 = vld [vmem:[#allocation5 + $0x578] sm:$0xff]
    %v250 = vld [vmem:[#allocation5 + $0x580] sm:$0xff]
    %v251 = vld [vmem:[#allocation5 + $0x588] sm:$0xff]
    %v252 = vld [vmem:[#allocation5 + $0x590] sm:$0xff]
    %v253 = vld [vmem:[#allocation5 + $0x598] sm:$0xff]
    %v254 = vld [vmem:[#allocation5 + $0x5a0] sm:$0xff]
    %v255 = vld [vmem:[#allocation5 + $0x5a8] sm:$0xff]
    %v256 = vld [vmem:[#allocation5 + $0x5b0] sm:$0xff]
    %v257 = vld [vmem:[#allocation5 + $0x5b8] sm:$0xff]
    %v258 = vld [vmem:[#allocation5 + $0x5c0] sm:$0xff]
    %v259 = vld [vmem:[#allocation5 + $0x5c8] sm:$0xff]
    %v260 = vld [vmem:[#allocation5 + $0x5d0] sm:$0xff]
    %v261 = vld [vmem:[#allocation5 + $0x5d8] sm:$0xff]
    %v262 = vld [vmem:[#allocation5 + $0x5e0] sm:$0xff]
    %v263 = vld [vmem:[#allocation5 + $0x5e8] sm:$0xff]
    %v264 = vld [vmem:[#allocation5 + $0x5f0] sm:$0xff]
    %v265 = vld [vmem:[#allocation5 + $0x5f8] sm:$0xff]
    %v266 = vld [vmem:[#allocation5 + $0x600] sm:$0xff]
    %v267 = vld [vmem:[#allocation5 + $0x608] sm:$0xff]
    %v268 = vld [vmem:[#allocation5 + $0x610] sm:$0xff]
    %v269 = vld [vmem:[#allocation5 + $0x618] sm:$0xff]
    %v270 = vld [vmem:[#allocation5 + $0x620] sm:$0xff]
    %v271 = vld [vmem:[#allocation5 + $0x628] sm:$0xff]
    %v272 = vld [vmem:[#allocation5 + $0x630] sm:$0xff]
    %v273 = vld [vmem:[#allocation5 + $0x638] sm:$0xff]
    %v274 = vld [vmem:[#allocation5 + $0x640] sm:$0xff]
    %v275 = vld [vmem:[#allocation5 + $0x648] sm:$0xff]
    %v276 = vld [vmem:[#allocation5 + $0x650] sm:$0xff]
    %v277 = vld [vmem:[#allocation5 + $0x658] sm:$0xff]
    %v278 = vld [vmem:[#allocation5 + $0x660] sm:$0xff]
    %v279 = vld [vmem:[#allocation5 + $0x668] sm:$0xff]
    %v280 = vld [vmem:[#allocation5 + $0x670] sm:$0xff]
    %v281 = vld [vmem:[#allocation5 + $0x678] sm:$0xff]
    %v282 = vld [vmem:[#allocation5 + $0x680] sm:$0xff]
    %v283 = vld [vmem:[#allocation5 + $0x688] sm:$0xff]
    %v284 = vld [vmem:[#allocation5 + $0x690] sm:$0xff]
    %v285 = vld [vmem:[#allocation5 + $0x698] sm:$0xff]
    %v286 = vld [vmem:[#allocation5 + $0x6a0] sm:$0xff]
    %v287 = vld [vmem:[#allocation5 + $0x6a8] sm:$0xff]
    %v288 = vld [vmem:[#allocation5 + $0x6b0] sm:$0xff]
    %v289 = vld [vmem:[#allocation5 + $0x6b8] sm:$0xff]
    %v290 = vld [vmem:[#allocation5 + $0x6c0] sm:$0xff]
    %v291 = vld [vmem:[#allocation5 + $0x6c8] sm:$0xff]
    %v292 = vld [vmem:[#allocation5 + $0x6d0] sm:$0xff]
    %v293 = vld [vmem:[#allocation5 + $0x6d8] sm:$0xff]
    %v294 = vld [vmem:[#allocation5 + $0x6e0] sm:$0xff]
    %v295 = vld [vmem:[#allocation5 + $0x6e8] sm:$0xff]
    %v296 = vld [vmem:[#allocation5 + $0x6f0] sm:$0xff]
    %v297 = vld [vmem:[#allocation5 + $0x6f8] sm:$0xff]
    %v298 = vld [vmem:[#allocation5 + $0x700] sm:$0xff]
    %v299 = vld [vmem:[#allocation5 + $0x708] sm:$0xff]
    %v300 = vld [vmem:[#allocation5 + $0x710] sm:$0xff]
    %v301 = vld [vmem:[#allocation5 + $0x718] sm:$0xff]
    %v302 = vld [vmem:[#allocation5 + $0x720] sm:$0xff]
    %v303 = vld [vmem:[#allocation5 + $0x728] sm:$0xff]
    %v304 = vld [vmem:[#allocation5 + $0x730] sm:$0xff]
    %v305 = vld [vmem:[#allocation5 + $0x738] sm:$0xff]
    %v306 = vld [vmem:[#allocation5 + $0x740] sm:$0xff]
    %v307 = vld [vmem:[#allocation5 + $0x748] sm:$0xff]
    %v308 = vld [vmem:[#allocation5 + $0x750] sm:$0xff]
    %v309 = vld [vmem:[#allocation5 + $0x758] sm:$0xff]
    %v310 = vld [vmem:[#allocation5 + $0x760] sm:$0xff]
    %v311 = vld [vmem:[#allocation5 + $0x768] sm:$0xff]
    %v312 = vld [vmem:[#allocation5 + $0x770] sm:$0xff]
    %v313 = vld [vmem:[#allocation5 + $0x778] sm:$0xff]
    %v314 = vld [vmem:[#allocation5 + $0x780] sm:$0xff]
    %v315 = vld [vmem:[#allocation5 + $0x788] sm:$0xff]
    %v316 = vld [vmem:[#allocation5 + $0x790] sm:$0xff]
    %v317 = vld [vmem:[#allocation5 + $0x798] sm:$0xff]
    %v318 = vld [vmem:[#allocation5 + $0x7a0] sm:$0xff]
    %v319 = vld [vmem:[#allocation5 + $0x7a8] sm:$0xff]
    %v320 = vld [vmem:[#allocation5 + $0x7b0] sm:$0xff]
    %v321 = vld [vmem:[#allocation5 + $0x7b8] sm:$0xff]
    %v322 = vld [vmem:[#allocation5 + $0x7c0] sm:$0xff]
    %v323 = vld [vmem:[#allocation5 + $0x7c8] sm:$0xff]
    %v324 = vld [vmem:[#allocation5 + $0x7d0] sm:$0xff]
    %v325 = vld [vmem:[#allocation5 + $0x7d8] sm:$0xff]
    %v326 = vld [vmem:[#allocation5 + $0x7e0] sm:$0xff]
    %v327 = vld [vmem:[#allocation5 + $0x7e8] sm:$0xff]
    %v328 = vld [vmem:[#allocation5 + $0x7f0] sm:$0xff]
    %v329 = vld [vmem:[#allocation5 + $0x7f8] sm:$0xff]
    %v330 = vld [vmem:[#allocation5 + $0x800] sm:$0xff]
    %v331 = vld [vmem:[#allocation5 + $0x808] sm:$0xff]
    %v332 = vld [vmem:[#allocation5 + $0x810] sm:$0xff]
    %v333 = vld [vmem:[#allocation5 + $0x818] sm:$0xff]
    %v334 = vld [vmem:[#allocation5 + $0x820] sm:$0xff]
    %v335 = vld [vmem:[#allocation5 + $0x828] sm:$0xff]
    %v336 = vld [vmem:[#allocation5 + $0x830] sm:$0xff]
    %v337 = vld [vmem:[#allocation5 + $0x838] sm:$0xff]
    %v338 = vld [vmem:[#allocation5 + $0x840] sm:$0xff]
    %v339 = vld [vmem:[#allocation5 + $0x848] sm:$0xff]
    %v340 = vld [vmem:[#allocation5 + $0x850] sm:$0xff]
    %v341 = vld [vmem:[#allocation5 + $0x858] sm:$0xff]
    %v342 = vld [vmem:[#allocation5 + $0x860] sm:$0xff]
    %v343 = vld [vmem:[#allocation5 + $0x868] sm:$0xff]
    %v344 = vld [vmem:[#allocation5 + $0x870] sm:$0xff]
    %v345 = vld [vmem:[#allocation5 + $0x878] sm:$0xff]
    %v346 = vld [vmem:[#allocation5 + $0x880] sm:$0xff]
    %v347 = vld [vmem:[#allocation5 + $0x888] sm:$0xff]
    %v348 = vld [vmem:[#allocation5 + $0x890] sm:$0xff]
    %v349 = vld [vmem:[#allocation5 + $0x898] sm:$0xff]
    %v350 = vld [vmem:[#allocation5 + $0x8a0] sm:$0xff]
    %v351 = vld [vmem:[#allocation5 + $0x8a8] sm:$0xff]
    %v352 = vld [vmem:[#allocation5 + $0x8b0] sm:$0xff]
    %v353 = vld [vmem:[#allocation5 + $0x8b8] sm:$0xff]
    %v354 = vld [vmem:[#allocation5 + $0x8c0] sm:$0xff]
    %v355 = vld [vmem:[#allocation5 + $0x8c8] sm:$0xff]
    %v356 = vld [vmem:[#allocation5 + $0x8d0] sm:$0xff]
    %v357 = vld [vmem:[#allocation5 + $0x8d8] sm:$0xff]
    %v358 = vld [vmem:[#allocation5 + $0x8e0] sm:$0xff]
    %v359 = vld [vmem:[#allocation5 + $0x8e8] sm:$0xff]
    %v360 = vld [vmem:[#allocation5 + $0x8f0] sm:$0xff]
    %v361 = vld [vmem:[#allocation5 + $0x8f8] sm:$0xff]
    %v362 = vld [vmem:[#allocation7] sm:$0x3f]
    %v364 = vlaneseq
    %v365 = vshrl.u32 %v364, 7
    %v366 = vsub.s32 0, %v365
    %v367 = vrot.slane %v362, %v366
    %v368 = vlaneseq
    %v369 = vshrl.u32 %v368, 7
    %v370 = vsub.s32 1, %v369
    %v371 = vrot.slane %v362, %v370
    %v372 = vlaneseq
    %v373 = vshrl.u32 %v372, 7
    %v374 = vsub.s32 2, %v373
    %v375 = vrot.slane %v362, %v374
    %v376 = vlaneseq
    %v377 = vshrl.u32 %v376, 7
    %v378 = vsub.s32 3, %v377
    %v379 = vrot.slane %v362, %v378
    %v380 = vlaneseq
    %v381 = vshrl.u32 %v380, 7
    %v382 = vsub.s32 4, %v381
    %v383 = vrot.slane %v362, %v382
    %v384 = vlaneseq
    %v385 = vshrl.u32 %v384, 7
    %v386 = vsub.s32 5, %v385
    %v387 = vrot.slane %v362, %v386
    %v397 = vunpack.c.l.b16 %v71
    %v398 = vunpack.c.h.b16 %v71
    %v399 = vunpack.c.l.b16 %v72
    %v400 = vunpack.c.h.b16 %v72
    %v401 = vunpack.c.l.b16 %v73
    %v402 = vunpack.c.h.b16 %v73
    %v403 = vpack.c.b16 %v397, %v397
    %v404 = vpack.c.b16 %v398, %v398
    %v405 = vpack.c.b16 %v399, %v399
    %v406 = vpack.c.b16 %v400, %v400
    %v407 = vpack.c.b16 %v401, %v401
    %v408 = vpack.c.b16 %v402, %v402
    %v703 = vunpack.c.l.b16 %v74
    %v704 = vunpack.c.h.b16 %v74
    %v705 = vunpack.c.l.b16 %v75
    %v706 = vunpack.c.h.b16 %v75
    %v707 = vunpack.c.l.b16 %v76
    %v708 = vunpack.c.h.b16 %v76
    %v709 = vunpack.c.l.b16 %v77
    %v710 = vunpack.c.h.b16 %v77
    %v711 = vunpack.c.l.b16 %v78
    %v712 = vunpack.c.h.b16 %v78
    %v713 = vunpack.c.l.b16 %v79
    %v714 = vunpack.c.h.b16 %v79
    %v715 = vunpack.c.l.b16 %v80
    %v716 = vunpack.c.h.b16 %v80
    %v717 = vunpack.c.l.b16 %v81
    %v718 = vunpack.c.h.b16 %v81
    %v719 = vunpack.c.l.b16 %v82
    %v720 = vunpack.c.h.b16 %v82
    %v721 = vunpack.c.l.b16 %v83
    %v722 = vunpack.c.h.b16 %v83
    %v723 = vunpack.c.l.b16 %v84
    %v724 = vunpack.c.h.b16 %v84
    %v725 = vunpack.c.l.b16 %v85
    %v726 = vunpack.c.h.b16 %v85
    %v727 = vunpack.c.l.b16 %v86
    %v728 = vunpack.c.h.b16 %v86
    %v729 = vunpack.c.l.b16 %v87
    %v730 = vunpack.c.h.b16 %v87
    %v731 = vunpack.c.l.b16 %v88
    %v732 = vunpack.c.h.b16 %v88
    %v733 = vunpack.c.l.b16 %v89
    %v734 = vunpack.c.h.b16 %v89
    %v735 = vunpack.c.l.b16 %v90
    %v736 = vunpack.c.h.b16 %v90
    %v737 = vunpack.c.l.b16 %v91
    %v738 = vunpack.c.h.b16 %v91
    %v739 = vunpack.c.l.b16 %v92
    %v740 = vunpack.c.h.b16 %v92
    %v741 = vunpack.c.l.b16 %v93
    %v742 = vunpack.c.h.b16 %v93
    %v743 = vunpack.c.l.b16 %v94
    %v744 = vunpack.c.h.b16 %v94
    %v745 = vunpack.c.l.b16 %v95
    %v746 = vunpack.c.h.b16 %v95
    %v747 = vunpack.c.l.b16 %v96
    %v748 = vunpack.c.h.b16 %v96
    %v749 = vunpack.c.l.b16 %v97
    %v750 = vunpack.c.h.b16 %v97
    %v751 = vunpack.c.l.b16 %v98
    %v752 = vunpack.c.h.b16 %v98
    %v753 = vunpack.c.l.b16 %v99
    %v754 = vunpack.c.h.b16 %v99
    %v755 = vunpack.c.l.b16 %v100
    %v756 = vunpack.c.h.b16 %v100
    %v757 = vunpack.c.l.b16 %v101
    %v758 = vunpack.c.h.b16 %v101
    %v759 = vunpack.c.l.b16 %v102
    %v760 = vunpack.c.h.b16 %v102
    %v761 = vunpack.c.l.b16 %v103
    %v762 = vunpack.c.h.b16 %v103
    %v763 = vunpack.c.l.b16 %v104
    %v764 = vunpack.c.h.b16 %v104
    %v765 = vunpack.c.l.b16 %v105
    %v766 = vunpack.c.h.b16 %v105
    %v767 = vunpack.c.l.b16 %v106
    %v768 = vunpack.c.h.b16 %v106
    %v769 = vunpack.c.l.b16 %v107
    %v770 = vunpack.c.h.b16 %v107
    %v771 = vunpack.c.l.b16 %v108
    %v772 = vunpack.c.h.b16 %v108
    %v773 = vunpack.c.l.b16 %v109
    %v774 = vunpack.c.h.b16 %v109
    %v775 = vunpack.c.l.b16 %v110
    %v776 = vunpack.c.h.b16 %v110
    %v777 = vunpack.c.l.b16 %v111
    %v778 = vunpack.c.h.b16 %v111
    %v779 = vunpack.c.l.b16 %v112
    %v780 = vunpack.c.h.b16 %v112
    %v781 = vunpack.c.l.b16 %v113
    %v782 = vunpack.c.h.b16 %v113
    %v783 = vunpack.c.l.b16 %v114
    %v784 = vunpack.c.h.b16 %v114
    %v785 = vunpack.c.l.b16 %v115
    %v786 = vunpack.c.h.b16 %v115
    %v787 = vunpack.c.l.b16 %v116
    %v788 = vunpack.c.h.b16 %v116
    %v789 = vunpack.c.l.b16 %v117
    %v790 = vunpack.c.h.b16 %v117
    %v791 = vunpack.c.l.b16 %v118
    %v792 = vunpack.c.h.b16 %v118
    %v793 = vunpack.c.l.b16 %v119
    %v794 = vunpack.c.h.b16 %v119
    %v795 = vunpack.c.l.b16 %v120
    %v796 = vunpack.c.h.b16 %v120
    %v797 = vunpack.c.l.b16 %v121
    %v798 = vunpack.c.h.b16 %v121
    %v799 = vunpack.c.l.b16 %v122
    %v800 = vunpack.c.h.b16 %v122
    %v801 = vunpack.c.l.b16 %v123
    %v802 = vunpack.c.h.b16 %v123
    %v803 = vunpack.c.l.b16 %v124
    %v804 = vunpack.c.h.b16 %v124
    %v805 = vunpack.c.l.b16 %v125
    %v806 = vunpack.c.h.b16 %v125
    %v807 = vunpack.c.l.b16 %v126
    %v808 = vunpack.c.h.b16 %v126
    %v809 = vunpack.c.l.b16 %v127
    %v810 = vunpack.c.h.b16 %v127
    %v811 = vunpack.c.l.b16 %v128
    %v812 = vunpack.c.h.b16 %v128
    %v813 = vunpack.c.l.b16 %v129
    %v814 = vunpack.c.h.b16 %v129
    %v815 = vunpack.c.l.b16 %v130
    %v816 = vunpack.c.h.b16 %v130
    %v817 = vunpack.c.l.b16 %v131
    %v818 = vunpack.c.h.b16 %v131
    %v819 = vunpack.c.l.b16 %v132
    %v820 = vunpack.c.h.b16 %v132
    %v821 = vunpack.c.l.b16 %v133
    %v822 = vunpack.c.h.b16 %v133
    %v823 = vunpack.c.l.b16 %v134
    %v824 = vunpack.c.h.b16 %v134
    %v825 = vunpack.c.l.b16 %v135
    %v826 = vunpack.c.h.b16 %v135
    %v827 = vunpack.c.l.b16 %v136
    %v828 = vunpack.c.h.b16 %v136
    %v829 = vunpack.c.l.b16 %v137
    %v830 = vunpack.c.h.b16 %v137
    %v831 = vunpack.c.l.b16 %v138
    %v832 = vunpack.c.h.b16 %v138
    %v833 = vunpack.c.l.b16 %v139
    %v834 = vunpack.c.h.b16 %v139
    %v835 = vunpack.c.l.b16 %v140
    %v836 = vunpack.c.h.b16 %v140
    %v837 = vunpack.c.l.b16 %v141
    %v838 = vunpack.c.h.b16 %v141
    %v839 = vunpack.c.l.b16 %v142
    %v840 = vunpack.c.h.b16 %v142
    %v841 = vunpack.c.l.b16 %v143
    %v842 = vunpack.c.h.b16 %v143
    %v843 = vunpack.c.l.b16 %v144
    %v844 = vunpack.c.h.b16 %v144
    %v845 = vunpack.c.l.b16 %v145
    %v846 = vunpack.c.h.b16 %v145
    %v847 = vunpack.c.l.b16 %v146
    %v848 = vunpack.c.h.b16 %v146
    %v849 = vunpack.c.l.b16 %v147
    %v850 = vunpack.c.h.b16 %v147
    %v851 = vunpack.c.l.b16 %v148
    %v852 = vunpack.c.h.b16 %v148
    %v853 = vunpack.c.l.b16 %v149
    %v854 = vunpack.c.h.b16 %v149
    %v855 = vunpack.c.l.b16 %v150
    %v856 = vunpack.c.h.b16 %v150
    %v857 = vunpack.c.l.b16 %v151
    %v858 = vunpack.c.h.b16 %v151
    %v859 = vunpack.c.l.b16 %v152
    %v860 = vunpack.c.h.b16 %v152
    %v861 = vunpack.c.l.b16 %v153
    %v862 = vunpack.c.h.b16 %v153
    %v863 = vunpack.c.l.b16 %v154
    %v864 = vunpack.c.h.b16 %v154
    %v865 = vunpack.c.l.b16 %v155
    %v866 = vunpack.c.h.b16 %v155
    %v867 = vunpack.c.l.b16 %v156
    %v868 = vunpack.c.h.b16 %v156
    %v869 = vunpack.c.l.b16 %v157
    %v870 = vunpack.c.h.b16 %v157
    %v871 = vunpack.c.l.b16 %v158
    %v872 = vunpack.c.h.b16 %v158
    %v873 = vunpack.c.l.b16 %v159
    %v874 = vunpack.c.h.b16 %v159
    %v875 = vunpack.c.l.b16 %v160
    %v876 = vunpack.c.h.b16 %v160
    %v877 = vunpack.c.l.b16 %v161
    %v878 = vunpack.c.h.b16 %v161
    %v879 = vunpack.c.l.b16 %v162
    %v880 = vunpack.c.h.b16 %v162
    %v881 = vunpack.c.l.b16 %v163
    %v882 = vunpack.c.h.b16 %v163
    %v883 = vunpack.c.l.b16 %v164
    %v884 = vunpack.c.h.b16 %v164
    %v885 = vunpack.c.l.b16 %v165
    %v886 = vunpack.c.h.b16 %v165
    %v887 = vunpack.c.l.b16 %v166
    %v888 = vunpack.c.h.b16 %v166
    %v889 = vunpack.c.l.b16 %v167
    %v890 = vunpack.c.h.b16 %v167
    %v891 = vunpack.c.l.b16 %v168
    %v892 = vunpack.c.h.b16 %v168
    %v893 = vunpack.c.l.b16 %v169
    %v894 = vunpack.c.h.b16 %v169
    %v895 = vunpack.c.l.b16 %v170
    %v896 = vunpack.c.h.b16 %v170
    %v897 = vunpack.c.l.b16 %v171
    %v898 = vunpack.c.h.b16 %v171
    %v899 = vunpack.c.l.b16 %v172
    %v900 = vunpack.c.h.b16 %v172
    %v901 = vunpack.c.l.b16 %v173
    %v902 = vunpack.c.h.b16 %v173
    %v903 = vunpack.c.l.b16 %v174
    %v904 = vunpack.c.h.b16 %v174
    %v905 = vunpack.c.l.b16 %v175
    %v906 = vunpack.c.h.b16 %v175
    %v907 = vunpack.c.l.b16 %v176
    %v908 = vunpack.c.h.b16 %v176
    %v909 = vunpack.c.l.b16 %v177
    %v910 = vunpack.c.h.b16 %v177
    %v911 = vunpack.c.l.b16 %v178
    %v912 = vunpack.c.h.b16 %v178
    %v913 = vunpack.c.l.b16 %v179
    %v914 = vunpack.c.h.b16 %v179
    %v915 = vunpack.c.l.b16 %v180
    %v916 = vunpack.c.h.b16 %v180
    %v917 = vunpack.c.l.b16 %v181
    %v918 = vunpack.c.h.b16 %v181
    %v919 = vunpack.c.l.b16 %v182
    %v920 = vunpack.c.h.b16 %v182
    %v921 = vunpack.c.l.b16 %v183
    %v922 = vunpack.c.h.b16 %v183
    %v923 = vunpack.c.l.b16 %v184
    %v924 = vunpack.c.h.b16 %v184
    %v925 = vunpack.c.l.b16 %v185
    %v926 = vunpack.c.h.b16 %v185
    %v927 = vunpack.c.l.b16 %v186
    %v928 = vunpack.c.h.b16 %v186
    %v929 = vunpack.c.l.b16 %v187
    %v930 = vunpack.c.h.b16 %v187
    %v931 = vunpack.c.l.b16 %v188
    %v932 = vunpack.c.h.b16 %v188
    %v933 = vunpack.c.l.b16 %v189
    %v934 = vunpack.c.h.b16 %v189
    %v935 = vunpack.c.l.b16 %v190
    %v936 = vunpack.c.h.b16 %v190
    %v937 = vunpack.c.l.b16 %v191
    %v938 = vunpack.c.h.b16 %v191
    %v939 = vunpack.c.l.b16 %v192
    %v940 = vunpack.c.h.b16 %v192
    %v941 = vunpack.c.l.b16 %v193
    %v942 = vunpack.c.h.b16 %v193
    %v943 = vunpack.c.l.b16 %v194
    %v944 = vunpack.c.h.b16 %v194
    %v945 = vunpack.c.l.b16 %v195
    %v946 = vunpack.c.h.b16 %v195
    %v947 = vunpack.c.l.b16 %v196
    %v948 = vunpack.c.h.b16 %v196
    %v949 = vunpack.c.l.b16 %v197
    %v950 = vunpack.c.h.b16 %v197
    %v951 = vunpack.c.l.b16 %v198
    %v952 = vunpack.c.h.b16 %v198
    %v953 = vunpack.c.l.b16 %v199
    %v954 = vunpack.c.h.b16 %v199
    %v955 = vunpack.c.l.b16 %v200
    %v956 = vunpack.c.h.b16 %v200
    %v957 = vunpack.c.l.b16 %v201
    %v958 = vunpack.c.h.b16 %v201
    %v959 = vunpack.c.l.b16 %v202
    %v960 = vunpack.c.h.b16 %v202
    %v961 = vunpack.c.l.b16 %v203
    %v962 = vunpack.c.h.b16 %v203
    %v963 = vunpack.c.l.b16 %v204
    %v964 = vunpack.c.h.b16 %v204
    %v965 = vunpack.c.l.b16 %v205
    %v966 = vunpack.c.h.b16 %v205
    %v967 = vunpack.c.l.b16 %v206
    %v968 = vunpack.c.h.b16 %v206
    %v969 = vunpack.c.l.b16 %v207
    %v970 = vunpack.c.h.b16 %v207
    %v971 = vunpack.c.l.b16 %v208
    %v972 = vunpack.c.h.b16 %v208
    %v973 = vunpack.c.l.b16 %v209
    %v974 = vunpack.c.h.b16 %v209
    %v975 = vunpack.c.l.b16 %v210
    %v976 = vunpack.c.h.b16 %v210
    %v977 = vunpack.c.l.b16 %v211
    %v978 = vunpack.c.h.b16 %v211
    %v979 = vunpack.c.l.b16 %v212
    %v980 = vunpack.c.h.b16 %v212
    %v981 = vunpack.c.l.b16 %v213
    %v982 = vunpack.c.h.b16 %v213
    %v983 = vunpack.c.l.b16 %v214
    %v984 = vunpack.c.h.b16 %v214
    %v985 = vunpack.c.l.b16 %v215
    %v986 = vunpack.c.h.b16 %v215
    %v987 = vunpack.c.l.b16 %v216
    %v988 = vunpack.c.h.b16 %v216
    %v989 = vunpack.c.l.b16 %v217
    %v990 = vunpack.c.h.b16 %v217
    %v991 = vunpack.c.l.b16 %v218
    %v992 = vunpack.c.h.b16 %v218
    %v993 = vunpack.c.l.b16 %v219
    %v994 = vunpack.c.h.b16 %v219
    %v995 = vunpack.c.l.b16 %v220
    %v996 = vunpack.c.h.b16 %v220
    %v997 = vunpack.c.l.b16 %v221
    %v998 = vunpack.c.h.b16 %v221
    %v999 = vunpack.c.l.b16 %v222
    %v1000 = vunpack.c.h.b16 %v222
    %v1001 = vunpack.c.l.b16 %v223
    %v1002 = vunpack.c.h.b16 %v223
    %v1003 = vunpack.c.l.b16 %v224
    %v1004 = vunpack.c.h.b16 %v224
    %v1005 = vunpack.c.l.b16 %v225
    %v1006 = vunpack.c.h.b16 %v225
    %v1007 = vunpack.c.l.b16 %v226
    %v1008 = vunpack.c.h.b16 %v226
    %v1009 = vunpack.c.l.b16 %v227
    %v1010 = vunpack.c.h.b16 %v227
    %v1011 = vunpack.c.l.b16 %v228
    %v1012 = vunpack.c.h.b16 %v228
    %v1013 = vunpack.c.l.b16 %v229
    %v1014 = vunpack.c.h.b16 %v229
    %v1015 = vunpack.c.l.b16 %v230
    %v1016 = vunpack.c.h.b16 %v230
    %v1017 = vunpack.c.l.b16 %v231
    %v1018 = vunpack.c.h.b16 %v231
    %v1019 = vunpack.c.l.b16 %v232
    %v1020 = vunpack.c.h.b16 %v232
    %v1021 = vunpack.c.l.b16 %v233
    %v1022 = vunpack.c.h.b16 %v233
    %v1023 = vunpack.c.l.b16 %v234
    %v1024 = vunpack.c.h.b16 %v234
    %v1025 = vunpack.c.l.b16 %v235
    %v1026 = vunpack.c.h.b16 %v235
    %v1027 = vunpack.c.l.b16 %v236
    %v1028 = vunpack.c.h.b16 %v236
    %v1029 = vunpack.c.l.b16 %v237
    %v1030 = vunpack.c.h.b16 %v237
    %v1031 = vunpack.c.l.b16 %v238
    %v1032 = vunpack.c.h.b16 %v238
    %v1033 = vunpack.c.l.b16 %v239
    %v1034 = vunpack.c.h.b16 %v239
    %v1035 = vunpack.c.l.b16 %v240
    %v1036 = vunpack.c.h.b16 %v240
    %v1037 = vunpack.c.l.b16 %v241
    %v1038 = vunpack.c.h.b16 %v241
    %v1039 = vunpack.c.l.b16 %v242
    %v1040 = vunpack.c.h.b16 %v242
    %v1041 = vunpack.c.l.b16 %v243
    %v1042 = vunpack.c.h.b16 %v243
    %v1043 = vunpack.c.l.b16 %v244
    %v1044 = vunpack.c.h.b16 %v244
    %v1045 = vunpack.c.l.b16 %v245
    %v1046 = vunpack.c.h.b16 %v245
    %v1047 = vunpack.c.l.b16 %v246
    %v1048 = vunpack.c.h.b16 %v246
    %v1049 = vunpack.c.l.b16 %v247
    %v1050 = vunpack.c.h.b16 %v247
    %v1051 = vunpack.c.l.b16 %v248
    %v1052 = vunpack.c.h.b16 %v248
    %v1053 = vunpack.c.l.b16 %v249
    %v1054 = vunpack.c.h.b16 %v249
    %v1055 = vunpack.c.l.b16 %v250
    %v1056 = vunpack.c.h.b16 %v250
    %v1057 = vunpack.c.l.b16 %v251
    %v1058 = vunpack.c.h.b16 %v251
    %v1059 = vunpack.c.l.b16 %v252
    %v1060 = vunpack.c.h.b16 %v252
    %v1061 = vunpack.c.l.b16 %v253
    %v1062 = vunpack.c.h.b16 %v253
    %v1063 = vunpack.c.l.b16 %v254
    %v1064 = vunpack.c.h.b16 %v254
    %v1065 = vunpack.c.l.b16 %v255
    %v1066 = vunpack.c.h.b16 %v255
    %v1067 = vunpack.c.l.b16 %v256
    %v1068 = vunpack.c.h.b16 %v256
    %v1069 = vunpack.c.l.b16 %v257
    %v1070 = vunpack.c.h.b16 %v257
    %v1071 = vunpack.c.l.b16 %v258
    %v1072 = vunpack.c.h.b16 %v258
    %v1073 = vunpack.c.l.b16 %v259
    %v1074 = vunpack.c.h.b16 %v259
    %v1075 = vunpack.c.l.b16 %v260
    %v1076 = vunpack.c.h.b16 %v260
    %v1077 = vunpack.c.l.b16 %v261
    %v1078 = vunpack.c.h.b16 %v261
    %v1079 = vunpack.c.l.b16 %v262
    %v1080 = vunpack.c.h.b16 %v262
    %v1081 = vunpack.c.l.b16 %v263
    %v1082 = vunpack.c.h.b16 %v263
    %v1083 = vunpack.c.l.b16 %v264
    %v1084 = vunpack.c.h.b16 %v264
    %v1085 = vunpack.c.l.b16 %v265
    %v1086 = vunpack.c.h.b16 %v265
    %v1087 = vunpack.c.l.b16 %v266
    %v1088 = vunpack.c.h.b16 %v266
    %v1089 = vunpack.c.l.b16 %v267
    %v1090 = vunpack.c.h.b16 %v267
    %v1091 = vunpack.c.l.b16 %v268
    %v1092 = vunpack.c.h.b16 %v268
    %v1093 = vunpack.c.l.b16 %v269
    %v1094 = vunpack.c.h.b16 %v269
    %v1095 = vunpack.c.l.b16 %v270
    %v1096 = vunpack.c.h.b16 %v270
    %v1097 = vunpack.c.l.b16 %v271
    %v1098 = vunpack.c.h.b16 %v271
    %v1099 = vunpack.c.l.b16 %v272
    %v1100 = vunpack.c.h.b16 %v272
    %v1101 = vunpack.c.l.b16 %v273
    %v1102 = vunpack.c.h.b16 %v273
    %v1103 = vunpack.c.l.b16 %v274
    %v1104 = vunpack.c.h.b16 %v274
    %v1105 = vunpack.c.l.b16 %v275
    %v1106 = vunpack.c.h.b16 %v275
    %v1107 = vunpack.c.l.b16 %v276
    %v1108 = vunpack.c.h.b16 %v276
    %v1109 = vunpack.c.l.b16 %v277
    %v1110 = vunpack.c.h.b16 %v277
    %v1111 = vunpack.c.l.b16 %v278
    %v1112 = vunpack.c.h.b16 %v278
    %v1113 = vunpack.c.l.b16 %v279
    %v1114 = vunpack.c.h.b16 %v279
    %v1115 = vunpack.c.l.b16 %v280
    %v1116 = vunpack.c.h.b16 %v280
    %v1117 = vunpack.c.l.b16 %v281
    %v1118 = vunpack.c.h.b16 %v281
    %v1119 = vunpack.c.l.b16 %v282
    %v1120 = vunpack.c.h.b16 %v282
    %v1121 = vunpack.c.l.b16 %v283
    %v1122 = vunpack.c.h.b16 %v283
    %v1123 = vunpack.c.l.b16 %v284
    %v1124 = vunpack.c.h.b16 %v284
    %v1125 = vunpack.c.l.b16 %v285
    %v1126 = vunpack.c.h.b16 %v285
    %v1127 = vunpack.c.l.b16 %v286
    %v1128 = vunpack.c.h.b16 %v286
    %v1129 = vunpack.c.l.b16 %v287
    %v1130 = vunpack.c.h.b16 %v287
    %v1131 = vunpack.c.l.b16 %v288
    %v1132 = vunpack.c.h.b16 %v288
    %v1133 = vunpack.c.l.b16 %v289
    %v1134 = vunpack.c.h.b16 %v289
    %v1135 = vunpack.c.l.b16 %v290
    %v1136 = vunpack.c.h.b16 %v290
    %v1137 = vunpack.c.l.b16 %v291
    %v1138 = vunpack.c.h.b16 %v291
    %v1139 = vunpack.c.l.b16 %v292
    %v1140 = vunpack.c.h.b16 %v292
    %v1141 = vunpack.c.l.b16 %v293
    %v1142 = vunpack.c.h.b16 %v293
    %v1143 = vunpack.c.l.b16 %v294
    %v1144 = vunpack.c.h.b16 %v294
    %v1145 = vunpack.c.l.b16 %v295
    %v1146 = vunpack.c.h.b16 %v295
    %v1147 = vunpack.c.l.b16 %v296
    %v1148 = vunpack.c.h.b16 %v296
    %v1149 = vunpack.c.l.b16 %v297
    %v1150 = vunpack.c.h.b16 %v297
    %v1151 = vunpack.c.l.b16 %v298
    %v1152 = vunpack.c.h.b16 %v298
    %v1153 = vunpack.c.l.b16 %v299
    %v1154 = vunpack.c.h.b16 %v299
    %v1155 = vunpack.c.l.b16 %v300
    %v1156 = vunpack.c.h.b16 %v300
    %v1157 = vunpack.c.l.b16 %v301
    %v1158 = vunpack.c.h.b16 %v301
    %v1159 = vunpack.c.l.b16 %v302
    %v1160 = vunpack.c.h.b16 %v302
    %v1161 = vunpack.c.l.b16 %v303
    %v1162 = vunpack.c.h.b16 %v303
    %v1163 = vunpack.c.l.b16 %v304
    %v1164 = vunpack.c.h.b16 %v304
    %v1165 = vunpack.c.l.b16 %v305
    %v1166 = vunpack.c.h.b16 %v305
    %v1167 = vunpack.c.l.b16 %v306
    %v1168 = vunpack.c.h.b16 %v306
    %v1169 = vunpack.c.l.b16 %v307
    %v1170 = vunpack.c.h.b16 %v307
    %v1171 = vunpack.c.l.b16 %v308
    %v1172 = vunpack.c.h.b16 %v308
    %v1173 = vunpack.c.l.b16 %v309
    %v1174 = vunpack.c.h.b16 %v309
    %v1175 = vunpack.c.l.b16 %v310
    %v1176 = vunpack.c.h.b16 %v310
    %v1177 = vunpack.c.l.b16 %v311
    %v1178 = vunpack.c.h.b16 %v311
    %v1179 = vunpack.c.l.b16 %v312
    %v1180 = vunpack.c.h.b16 %v312
    %v1181 = vunpack.c.l.b16 %v313
    %v1182 = vunpack.c.h.b16 %v313
    %v1183 = vunpack.c.l.b16 %v314
    %v1184 = vunpack.c.h.b16 %v314
    %v1185 = vunpack.c.l.b16 %v315
    %v1186 = vunpack.c.h.b16 %v315
    %v1187 = vunpack.c.l.b16 %v316
    %v1188 = vunpack.c.h.b16 %v316
    %v1189 = vunpack.c.l.b16 %v317
    %v1190 = vunpack.c.h.b16 %v317
    %v1191 = vunpack.c.l.b16 %v318
    %v1192 = vunpack.c.h.b16 %v318
    %v1193 = vunpack.c.l.b16 %v319
    %v1194 = vunpack.c.h.b16 %v319
    %v1195 = vunpack.c.l.b16 %v320
    %v1196 = vunpack.c.h.b16 %v320
    %v1197 = vunpack.c.l.b16 %v321
    %v1198 = vunpack.c.h.b16 %v321
    %v1199 = vunpack.c.l.b16 %v322
    %v1200 = vunpack.c.h.b16 %v322
    %v1201 = vunpack.c.l.b16 %v323
    %v1202 = vunpack.c.h.b16 %v323
    %v1203 = vunpack.c.l.b16 %v324
    %v1204 = vunpack.c.h.b16 %v324
    %v1205 = vunpack.c.l.b16 %v325
    %v1206 = vunpack.c.h.b16 %v325
    %v1207 = vunpack.c.l.b16 %v326
    %v1208 = vunpack.c.h.b16 %v326
    %v1209 = vunpack.c.l.b16 %v327
    %v1210 = vunpack.c.h.b16 %v327
    %v1211 = vunpack.c.l.b16 %v328
    %v1212 = vunpack.c.h.b16 %v328
    %v1213 = vunpack.c.l.b16 %v329
    %v1214 = vunpack.c.h.b16 %v329
    %v1215 = vunpack.c.l.b16 %v330
    %v1216 = vunpack.c.h.b16 %v330
    %v1217 = vunpack.c.l.b16 %v331
    %v1218 = vunpack.c.h.b16 %v331
    %v1219 = vunpack.c.l.b16 %v332
    %v1220 = vunpack.c.h.b16 %v332
    %v1221 = vunpack.c.l.b16 %v333
    %v1222 = vunpack.c.h.b16 %v333
    %v1223 = vunpack.c.l.b16 %v334
    %v1224 = vunpack.c.h.b16 %v334
    %v1225 = vunpack.c.l.b16 %v335
    %v1226 = vunpack.c.h.b16 %v335
    %v1227 = vunpack.c.l.b16 %v336
    %v1228 = vunpack.c.h.b16 %v336
    %v1229 = vunpack.c.l.b16 %v337
    %v1230 = vunpack.c.h.b16 %v337
    %v1231 = vunpack.c.l.b16 %v338
    %v1232 = vunpack.c.h.b16 %v338
    %v1233 = vunpack.c.l.b16 %v339
    %v1234 = vunpack.c.h.b16 %v339
    %v1235 = vunpack.c.l.b16 %v340
    %v1236 = vunpack.c.h.b16 %v340
    %v1237 = vunpack.c.l.b16 %v341
    %v1238 = vunpack.c.h.b16 %v341
    %v1239 = vunpack.c.l.b16 %v342
    %v1240 = vunpack.c.h.b16 %v342
    %v1241 = vunpack.c.l.b16 %v343
    %v1242 = vunpack.c.h.b16 %v343
    %v1243 = vunpack.c.l.b16 %v344
    %v1244 = vunpack.c.h.b16 %v344
    %v1245 = vunpack.c.l.b16 %v345
    %v1246 = vunpack.c.h.b16 %v345
    %v1247 = vunpack.c.l.b16 %v346
    %v1248 = vunpack.c.h.b16 %v346
    %v1249 = vunpack.c.l.b16 %v347
    %v1250 = vunpack.c.h.b16 %v347
    %v1251 = vunpack.c.l.b16 %v348
    %v1252 = vunpack.c.h.b16 %v348
    %v1253 = vunpack.c.l.b16 %v349
    %v1254 = vunpack.c.h.b16 %v349
    %v1255 = vunpack.c.l.b16 %v350
    %v1256 = vunpack.c.h.b16 %v350
    %v1257 = vunpack.c.l.b16 %v351
    %v1258 = vunpack.c.h.b16 %v351
    %v1259 = vunpack.c.l.b16 %v352
    %v1260 = vunpack.c.h.b16 %v352
    %v1261 = vunpack.c.l.b16 %v353
    %v1262 = vunpack.c.h.b16 %v353
    %v1263 = vunpack.c.l.b16 %v354
    %v1264 = vunpack.c.h.b16 %v354
    %v1265 = vunpack.c.l.b16 %v355
    %v1266 = vunpack.c.h.b16 %v355
    %v1267 = vunpack.c.l.b16 %v356
    %v1268 = vunpack.c.h.b16 %v356
    %v1269 = vunpack.c.l.b16 %v357
    %v1270 = vunpack.c.h.b16 %v357
    %v1271 = vunpack.c.l.b16 %v358
    %v1272 = vunpack.c.h.b16 %v358
    %v1273 = vunpack.c.l.b16 %v359
    %v1274 = vunpack.c.h.b16 %v359
    %v1275 = vunpack.c.l.b16 %v360
    %v1276 = vunpack.c.h.b16 %v360
    %v1277 = vunpack.c.l.b16 %v361
    %v1278 = vunpack.c.h.b16 %v361
    %v1279 = vpack.c.b16 %v709, %v703
    %v1280 = vpack.c.b16 %v710, %v704
    %v1281 = vpack.c.b16 %v711, %v705
    %v1282 = vpack.c.b16 %v712, %v706
    %v1283 = vpack.c.b16 %v713, %v707
    %v1284 = vpack.c.b16 %v714, %v708
    %v1285 = vpack.c.b16 %v721, %v715
    %v1286 = vpack.c.b16 %v722, %v716
    %v1287 = vpack.c.b16 %v723, %v717
    %v1288 = vpack.c.b16 %v724, %v718
    %v1289 = vpack.c.b16 %v725, %v719
    %v1290 = vpack.c.b16 %v726, %v720
    %v1291 = vpack.c.b16 %v733, %v727
    %v1292 = vpack.c.b16 %v734, %v728
    %v1293 = vpack.c.b16 %v735, %v729
    %v1294 = vpack.c.b16 %v736, %v730
    %v1295 = vpack.c.b16 %v737, %v731
    %v1296 = vpack.c.b16 %v738, %v732
    %v1297 = vpack.c.b16 %v745, %v739
    %v1298 = vpack.c.b16 %v746, %v740
    %v1299 = vpack.c.b16 %v747, %v741
    %v1300 = vpack.c.b16 %v748, %v742
    %v1301 = vpack.c.b16 %v749, %v743
    %v1302 = vpack.c.b16 %v750, %v744
    %v1303 = vpack.c.b16 %v757, %v751
    %v1304 = vpack.c.b16 %v758, %v752
    %v1305 = vpack.c.b16 %v759, %v753
    %v1306 = vpack.c.b16 %v760, %v754
    %v1307 = vpack.c.b16 %v761, %v755
    %v1308 = vpack.c.b16 %v762, %v756
    %v1309 = vpack.c.b16 %v769, %v763
    %v1310 = vpack.c.b16 %v770, %v764
    %v1311 = vpack.c.b16 %v771, %v765
    %v1312 = vpack.c.b16 %v772, %v766
    %v1313 = vpack.c.b16 %v773, %v767
    %v1314 = vpack.c.b16 %v774, %v768
    %v1315 = vpack.c.b16 %v781, %v775
    %v1316 = vpack.c.b16 %v782, %v776
    %v1317 = vpack.c.b16 %v783, %v777
    %v1318 = vpack.c.b16 %v784, %v778
    %v1319 = vpack.c.b16 %v785, %v779
    %v1320 = vpack.c.b16 %v786, %v780
    %v1321 = vpack.c.b16 %v793, %v787
    %v1322 = vpack.c.b16 %v794, %v788
    %v1323 = vpack.c.b16 %v795, %v789
    %v1324 = vpack.c.b16 %v796, %v790
    %v1325 = vpack.c.b16 %v797, %v791
    %v1326 = vpack.c.b16 %v798, %v792
    %v1327 = vpack.c.b16 %v805, %v799
    %v1328 = vpack.c.b16 %v806, %v800
    %v1329 = vpack.c.b16 %v807, %v801
    %v1330 = vpack.c.b16 %v808, %v802
    %v1331 = vpack.c.b16 %v809, %v803
    %v1332 = vpack.c.b16 %v810, %v804
    %v1333 = vpack.c.b16 %v817, %v811
    %v1334 = vpack.c.b16 %v818, %v812
    %v1335 = vpack.c.b16 %v819, %v813
    %v1336 = vpack.c.b16 %v820, %v814
    %v1337 = vpack.c.b16 %v821, %v815
    %v1338 = vpack.c.b16 %v822, %v816
    %v1339 = vpack.c.b16 %v829, %v823
    %v1340 = vpack.c.b16 %v830, %v824
    %v1341 = vpack.c.b16 %v831, %v825
    %v1342 = vpack.c.b16 %v832, %v826
    %v1343 = vpack.c.b16 %v833, %v827
    %v1344 = vpack.c.b16 %v834, %v828
    %v1345 = vpack.c.b16 %v841, %v835
    %v1346 = vpack.c.b16 %v842, %v836
    %v1347 = vpack.c.b16 %v843, %v837
    %v1348 = vpack.c.b16 %v844, %v838
    %v1349 = vpack.c.b16 %v845, %v839
    %v1350 = vpack.c.b16 %v846, %v840
    %v1351 = vpack.c.b16 %v853, %v847
    %v1352 = vpack.c.b16 %v854, %v848
    %v1353 = vpack.c.b16 %v855, %v849
    %v1354 = vpack.c.b16 %v856, %v850
    %v1355 = vpack.c.b16 %v857, %v851
    %v1356 = vpack.c.b16 %v858, %v852
    %v1357 = vpack.c.b16 %v865, %v859
    %v1358 = vpack.c.b16 %v866, %v860
    %v1359 = vpack.c.b16 %v867, %v861
    %v1360 = vpack.c.b16 %v868, %v862
    %v1361 = vpack.c.b16 %v869, %v863
    %v1362 = vpack.c.b16 %v870, %v864
    %v1363 = vpack.c.b16 %v877, %v871
    %v1364 = vpack.c.b16 %v878, %v872
    %v1365 = vpack.c.b16 %v879, %v873
    %v1366 = vpack.c.b16 %v880, %v874
    %v1367 = vpack.c.b16 %v881, %v875
    %v1368 = vpack.c.b16 %v882, %v876
    %v1369 = vpack.c.b16 %v889, %v883
    %v1370 = vpack.c.b16 %v890, %v884
    %v1371 = vpack.c.b16 %v891, %v885
    %v1372 = vpack.c.b16 %v892, %v886
    %v1373 = vpack.c.b16 %v893, %v887
    %v1374 = vpack.c.b16 %v894, %v888
    %v1375 = vpack.c.b16 %v901, %v895
    %v1376 = vpack.c.b16 %v902, %v896
    %v1377 = vpack.c.b16 %v903, %v897
    %v1378 = vpack.c.b16 %v904, %v898
    %v1379 = vpack.c.b16 %v905, %v899
    %v1380 = vpack.c.b16 %v906, %v900
    %v1381 = vpack.c.b16 %v913, %v907
    %v1382 = vpack.c.b16 %v914, %v908
    %v1383 = vpack.c.b16 %v915, %v909
    %v1384 = vpack.c.b16 %v916, %v910
    %v1385 = vpack.c.b16 %v917, %v911
    %v1386 = vpack.c.b16 %v918, %v912
    %v1387 = vpack.c.b16 %v925, %v919
    %v1388 = vpack.c.b16 %v926, %v920
    %v1389 = vpack.c.b16 %v927, %v921
    %v1390 = vpack.c.b16 %v928, %v922
    %v1391 = vpack.c.b16 %v929, %v923
    %v1392 = vpack.c.b16 %v930, %v924
    %v1393 = vpack.c.b16 %v937, %v931
    %v1394 = vpack.c.b16 %v938, %v932
    %v1395 = vpack.c.b16 %v939, %v933
    %v1396 = vpack.c.b16 %v940, %v934
    %v1397 = vpack.c.b16 %v941, %v935
    %v1398 = vpack.c.b16 %v942, %v936
    %v1399 = vpack.c.b16 %v949, %v943
    %v1400 = vpack.c.b16 %v950, %v944
    %v1401 = vpack.c.b16 %v951, %v945
    %v1402 = vpack.c.b16 %v952, %v946
    %v1403 = vpack.c.b16 %v953, %v947
    %v1404 = vpack.c.b16 %v954, %v948
    %v1405 = vpack.c.b16 %v961, %v955
    %v1406 = vpack.c.b16 %v962, %v956
    %v1407 = vpack.c.b16 %v963, %v957
    %v1408 = vpack.c.b16 %v964, %v958
    %v1409 = vpack.c.b16 %v965, %v959
    %v1410 = vpack.c.b16 %v966, %v960
    %v1411 = vpack.c.b16 %v973, %v967
    %v1412 = vpack.c.b16 %v974, %v968
    %v1413 = vpack.c.b16 %v975, %v969
    %v1414 = vpack.c.b16 %v976, %v970
    %v1415 = vpack.c.b16 %v977, %v971
    %v1416 = vpack.c.b16 %v978, %v972
    %v1417 = vpack.c.b16 %v985, %v979
    %v1418 = vpack.c.b16 %v986, %v980
    %v1419 = vpack.c.b16 %v987, %v981
    %v1420 = vpack.c.b16 %v988, %v982
    %v1421 = vpack.c.b16 %v989, %v983
    %v1422 = vpack.c.b16 %v990, %v984
    %v1423 = vpack.c.b16 %v997, %v991
    %v1424 = vpack.c.b16 %v998, %v992
    %v1425 = vpack.c.b16 %v999, %v993
    %v1426 = vpack.c.b16 %v1000, %v994
    %v1427 = vpack.c.b16 %v1001, %v995
    %v1428 = vpack.c.b16 %v1002, %v996
    %v1429 = vpack.c.b16 %v1009, %v1003
    %v1430 = vpack.c.b16 %v1010, %v1004
    %v1431 = vpack.c.b16 %v1011, %v1005
    %v1432 = vpack.c.b16 %v1012, %v1006
    %v1433 = vpack.c.b16 %v1013, %v1007
    %v1434 = vpack.c.b16 %v1014, %v1008
    %v1435 = vpack.c.b16 %v1021, %v1015
    %v1436 = vpack.c.b16 %v1022, %v1016
    %v1437 = vpack.c.b16 %v1023, %v1017
    %v1438 = vpack.c.b16 %v1024, %v1018
    %v1439 = vpack.c.b16 %v1025, %v1019
    %v1440 = vpack.c.b16 %v1026, %v1020
    %v1441 = vpack.c.b16 %v1033, %v1027
    %v1442 = vpack.c.b16 %v1034, %v1028
    %v1443 = vpack.c.b16 %v1035, %v1029
    %v1444 = vpack.c.b16 %v1036, %v1030
    %v1445 = vpack.c.b16 %v1037, %v1031
    %v1446 = vpack.c.b16 %v1038, %v1032
    %v1447 = vpack.c.b16 %v1045, %v1039
    %v1448 = vpack.c.b16 %v1046, %v1040
    %v1449 = vpack.c.b16 %v1047, %v1041
    %v1450 = vpack.c.b16 %v1048, %v1042
    %v1451 = vpack.c.b16 %v1049, %v1043
    %v1452 = vpack.c.b16 %v1050, %v1044
    %v1453 = vpack.c.b16 %v1057, %v1051
    %v1454 = vpack.c.b16 %v1058, %v1052
    %v1455 = vpack.c.b16 %v1059, %v1053
    %v1456 = vpack.c.b16 %v1060, %v1054
    %v1457 = vpack.c.b16 %v1061, %v1055
    %v1458 = vpack.c.b16 %v1062, %v1056
    %v1459 = vpack.c.b16 %v1069, %v1063
    %v1460 = vpack.c.b16 %v1070, %v1064
    %v1461 = vpack.c.b16 %v1071, %v1065
    %v1462 = vpack.c.b16 %v1072, %v1066
    %v1463 = vpack.c.b16 %v1073, %v1067
    %v1464 = vpack.c.b16 %v1074, %v1068
    %v1465 = vpack.c.b16 %v1081, %v1075
    %v1466 = vpack.c.b16 %v1082, %v1076
    %v1467 = vpack.c.b16 %v1083, %v1077
    %v1468 = vpack.c.b16 %v1084, %v1078
    %v1469 = vpack.c.b16 %v1085, %v1079
    %v1470 = vpack.c.b16 %v1086, %v1080
    %v1471 = vpack.c.b16 %v1093, %v1087
    %v1472 = vpack.c.b16 %v1094, %v1088
    %v1473 = vpack.c.b16 %v1095, %v1089
    %v1474 = vpack.c.b16 %v1096, %v1090
    %v1475 = vpack.c.b16 %v1097, %v1091
    %v1476 = vpack.c.b16 %v1098, %v1092
    %v1477 = vpack.c.b16 %v1105, %v1099
    %v1478 = vpack.c.b16 %v1106, %v1100
    %v1479 = vpack.c.b16 %v1107, %v1101
    %v1480 = vpack.c.b16 %v1108, %v1102
    %v1481 = vpack.c.b16 %v1109, %v1103
    %v1482 = vpack.c.b16 %v1110, %v1104
    %v1483 = vpack.c.b16 %v1117, %v1111
    %v1484 = vpack.c.b16 %v1118, %v1112
    %v1485 = vpack.c.b16 %v1119, %v1113
    %v1486 = vpack.c.b16 %v1120, %v1114
    %v1487 = vpack.c.b16 %v1121, %v1115
    %v1488 = vpack.c.b16 %v1122, %v1116
    %v1489 = vpack.c.b16 %v1129, %v1123
    %v1490 = vpack.c.b16 %v1130, %v1124
    %v1491 = vpack.c.b16 %v1131, %v1125
    %v1492 = vpack.c.b16 %v1132, %v1126
    %v1493 = vpack.c.b16 %v1133, %v1127
    %v1494 = vpack.c.b16 %v1134, %v1128
    %v1495 = vpack.c.b16 %v1141, %v1135
    %v1496 = vpack.c.b16 %v1142, %v1136
    %v1497 = vpack.c.b16 %v1143, %v1137
    %v1498 = vpack.c.b16 %v1144, %v1138
    %v1499 = vpack.c.b16 %v1145, %v1139
    %v1500 = vpack.c.b16 %v1146, %v1140
    %v1501 = vpack.c.b16 %v1153, %v1147
    %v1502 = vpack.c.b16 %v1154, %v1148
    %v1503 = vpack.c.b16 %v1155, %v1149
    %v1504 = vpack.c.b16 %v1156, %v1150
    %v1505 = vpack.c.b16 %v1157, %v1151
    %v1506 = vpack.c.b16 %v1158, %v1152
    %v1507 = vpack.c.b16 %v1165, %v1159
    %v1508 = vpack.c.b16 %v1166, %v1160
    %v1509 = vpack.c.b16 %v1167, %v1161
    %v1510 = vpack.c.b16 %v1168, %v1162
    %v1511 = vpack.c.b16 %v1169, %v1163
    %v1512 = vpack.c.b16 %v1170, %v1164
    %v1513 = vpack.c.b16 %v1177, %v1171
    %v1514 = vpack.c.b16 %v1178, %v1172
    %v1515 = vpack.c.b16 %v1179, %v1173
    %v1516 = vpack.c.b16 %v1180, %v1174
    %v1517 = vpack.c.b16 %v1181, %v1175
    %v1518 = vpack.c.b16 %v1182, %v1176
    %v1519 = vpack.c.b16 %v1189, %v1183
    %v1520 = vpack.c.b16 %v1190, %v1184
    %v1521 = vpack.c.b16 %v1191, %v1185
    %v1522 = vpack.c.b16 %v1192, %v1186
    %v1523 = vpack.c.b16 %v1193, %v1187
    %v1524 = vpack.c.b16 %v1194, %v1188
    %v1525 = vpack.c.b16 %v1201, %v1195
    %v1526 = vpack.c.b16 %v1202, %v1196
    %v1527 = vpack.c.b16 %v1203, %v1197
    %v1528 = vpack.c.b16 %v1204, %v1198
    %v1529 = vpack.c.b16 %v1205, %v1199
    %v1530 = vpack.c.b16 %v1206, %v1200
    %v1531 = vpack.c.b16 %v1213, %v1207
    %v1532 = vpack.c.b16 %v1214, %v1208
    %v1533 = vpack.c.b16 %v1215, %v1209
    %v1534 = vpack.c.b16 %v1216, %v1210
    %v1535 = vpack.c.b16 %v1217, %v1211
    %v1536 = vpack.c.b16 %v1218, %v1212
    %v1537 = vpack.c.b16 %v1225, %v1219
    %v1538 = vpack.c.b16 %v1226, %v1220
    %v1539 = vpack.c.b16 %v1227, %v1221
    %v1540 = vpack.c.b16 %v1228, %v1222
    %v1541 = vpack.c.b16 %v1229, %v1223
    %v1542 = vpack.c.b16 %v1230, %v1224
    %v1543 = vpack.c.b16 %v1237, %v1231
    %v1544 = vpack.c.b16 %v1238, %v1232
    %v1545 = vpack.c.b16 %v1239, %v1233
    %v1546 = vpack.c.b16 %v1240, %v1234
    %v1547 = vpack.c.b16 %v1241, %v1235
    %v1548 = vpack.c.b16 %v1242, %v1236
    %v1549 = vpack.c.b16 %v1249, %v1243
    %v1550 = vpack.c.b16 %v1250, %v1244
    %v1551 = vpack.c.b16 %v1251, %v1245
    %v1552 = vpack.c.b16 %v1252, %v1246
    %v1553 = vpack.c.b16 %v1253, %v1247
    %v1554 = vpack.c.b16 %v1254, %v1248
    %v1555 = vpack.c.b16 %v1261, %v1255
    %v1556 = vpack.c.b16 %v1262, %v1256
    %v1557 = vpack.c.b16 %v1263, %v1257
    %v1558 = vpack.c.b16 %v1264, %v1258
    %v1559 = vpack.c.b16 %v1265, %v1259
    %v1560 = vpack.c.b16 %v1266, %v1260
    %v1561 = vpack.c.b16 %v1273, %v1267
    %v1562 = vpack.c.b16 %v1274, %v1268
    %v1563 = vpack.c.b16 %v1275, %v1269
    %v1564 = vpack.c.b16 %v1276, %v1270
    %v1565 = vpack.c.b16 %v1277, %v1271
    %v1566 = vpack.c.b16 %v1278, %v1272
    %1855 = vmatprep.subr.bf16.mxu0 %v1280
    %1856 = vmatpush1.bf16.xpose.msra.mxu0 %v1279
    %1857 = vmatprep.subr.bf16.mxu0 %v1286
    %1858 = vmatpush1.bf16.xpose.msra.mxu0 %v1285
    %1859 = vmatprep.subr.bf16.mxu0 %v1292
    %1860 = vmatpush1.bf16.xpose.msra.mxu0 %v1291
    %1861 = vmatprep.subr.bf16.mxu0 %v1298
    %1862 = vmatpush1.bf16.xpose.msra.mxu0 %v1297
    %1863 = vmatprep.subr.bf16.mxu0 %v1304
    %1864 = vmatpush1.bf16.xpose.msra.mxu0 %v1303
    %1865 = vmatprep.subr.bf16.mxu0 %v1310
    %1866 = vmatpush1.bf16.xpose.msra.mxu0 %v1309
    %1867 = vmatprep.subr.bf16.mxu0 %v1316
    %1868 = vmatpush1.bf16.xpose.msra.mxu0 %v1315
    %1869 = vmatprep.subr.bf16.mxu0 %v1322
    %1870 = vmatpush1.bf16.xpose.msra.mxu0 %v1321
    %1871 = vmatprep.subr.bf16.mxu0 %v1328
    %1872 = vmatpush1.bf16.xpose.msra.mxu0 %v1327
    %1873 = vmatprep.subr.bf16.mxu0 %v1334
    %1874 = vmatpush1.bf16.xpose.msra.mxu0 %v1333
    %1875 = vmatprep.subr.bf16.mxu0 %v1340
    %1876 = vmatpush1.bf16.xpose.msra.mxu0 %v1339
    %1877 = vmatprep.subr.bf16.mxu0 %v1346
    %1878 = vmatpush1.bf16.xpose.msra.mxu0 %v1345
    %1879 = vmatprep.subr.bf16.mxu0 %v1352
    %1880 = vmatpush1.bf16.xpose.msra.mxu0 %v1351
    %1881 = vmatprep.subr.bf16.mxu0 %v1358
    %1882 = vmatpush1.bf16.xpose.msra.mxu0 %v1357
    %1883 = vmatprep.subr.bf16.mxu0 %v1364
    %1884 = vmatpush1.bf16.xpose.msra.mxu0 %v1363
    %1885 = vmatprep.subr.bf16.mxu0 %v1370
    %1886 = vmatpush1.bf16.xpose.msra.mxu0 %v1369
    %1887 = vmatprep.mubr.bf16.mxu0 %v404
    %1888 = vmatmul.mubr.bf16.gmra.mrb[0].mxu0 %v403
    %v1889 = vpop.f32.mrb[0].mxu0
    %v1890 = vadd.f32 %v367, %v1889
    %v1891 = vpop.f32.mrb[0].mxu0
    %v1892 = vadd.f32 %v371, %v1891
    %v1893 = vpop.f32.mrb[0].mxu0
    %v1894 = vpop.f32.mrb[0].mxu0
    %1895 = vdwg.mxu0
    %1896 = vmatprep.subr.bf16.mxu0 %v1282
    %1897 = vmatpush1.bf16.xpose.msra.mxu0 %v1281
    %1898 = vmatprep.subr.bf16.mxu0 %v1288
    %1899 = vmatpush1.bf16.xpose.msra.mxu0 %v1287
    %1900 = vmatprep.subr.bf16.mxu0 %v1294
    %1901 = vmatpush1.bf16.xpose.msra.mxu0 %v1293
    %1902 = vmatprep.subr.bf16.mxu0 %v1300
    %1903 = vmatpush1.bf16.xpose.msra.mxu0 %v1299
    %1904 = vmatprep.subr.bf16.mxu0 %v1306
    %1905 = vmatpush1.bf16.xpose.msra.mxu0 %v1305
    %1906 = vmatprep.subr.bf16.mxu0 %v1312
    %1907 = vmatpush1.bf16.xpose.msra.mxu0 %v1311
    %1908 = vmatprep.subr.bf16.mxu0 %v1318
    %1909 = vmatpush1.bf16.xpose.msra.mxu0 %v1317
    %1910 = vmatprep.subr.bf16.mxu0 %v1324
    %1911 = vmatpush1.bf16.xpose.msra.mxu0 %v1323
    %1912 = vmatprep.subr.bf16.mxu0 %v1330
    %1913 = vmatpush1.bf16.xpose.msra.mxu0 %v1329
    %1914 = vmatprep.subr.bf16.mxu0 %v1336
    %1915 = vmatpush1.bf16.xpose.msra.mxu0 %v1335
    %1916 = vmatprep.subr.bf16.mxu0 %v1342
    %1917 = vmatpush1.bf16.xpose.msra.mxu0 %v1341
    %1918 = vmatprep.subr.bf16.mxu0 %v1348
    %1919 = vmatpush1.bf16.xpose.msra.mxu0 %v1347
    %1920 = vmatprep.subr.bf16.mxu0 %v1354
    %1921 = vmatpush1.bf16.xpose.msra.mxu0 %v1353
    %1922 = vmatprep.subr.bf16.mxu0 %v1360
    %1923 = vmatpush1.bf16.xpose.msra.mxu0 %v1359
    %1924 = vmatprep.subr.bf16.mxu0 %v1366
    %1925 = vmatpush1.bf16.xpose.msra.mxu0 %v1365
    %1926 = vmatprep.subr.bf16.mxu0 %v1372
    %1927 = vmatpush1.bf16.xpose.msra.mxu0 %v1371
    %1928 = vmatprep.mubr.bf16.mxu0 %v406
    %1929 = vmatmul.mubr.bf16.gmra.mrb[0].mxu0 %v405
    %v1930 = vpop.f32.mrb[0].mxu0
    %v1931 = vadd.f32 %v1890, %v1930
    %v1932 = vpop.f32.mrb[0].mxu0
    %v1933 = vadd.f32 %v1892, %v1932
    %v1934 = vpop.f32.mrb[0].mxu0
    %v1935 = vpop.f32.mrb[0].mxu0
    %1936 = vdwg.mxu0
    %1937 = vmatprep.subr.bf16.mxu0 %v1284
    %1938 = vmatpush1.bf16.xpose.msra.mxu0 %v1283
    %1939 = vmatprep.subr.bf16.mxu0 %v1290
    %1940 = vmatpush1.bf16.xpose.msra.mxu0 %v1289
    %1941 = vmatprep.subr.bf16.mxu0 %v1296
    %1942 = vmatpush1.bf16.xpose.msra.mxu0 %v1295
    %1943 = vmatprep.subr.bf16.mxu0 %v1302
    %1944 = vmatpush1.bf16.xpose.msra.mxu0 %v1301
    %1945 = vmatprep.subr.bf16.mxu0 %v1308
    %1946 = vmatpush1.bf16.xpose.msra.mxu0 %v1307
    %1947 = vmatprep.subr.bf16.mxu0 %v1314
    %1948 = vmatpush1.bf16.xpose.msra.mxu0 %v1313
    %1949 = vmatprep.subr.bf16.mxu0 %v1320
    %1950 = vmatpush1.bf16.xpose.msra.mxu0 %v1319
    %1951 = vmatprep.subr.bf16.mxu0 %v1326
    %1952 = vmatpush1.bf16.xpose.msra.mxu0 %v1325
    %1953 = vmatprep.subr.bf16.mxu0 %v1332
    %1954 = vmatpush1.bf16.xpose.msra.mxu0 %v1331
    %1955 = vmatprep.subr.bf16.mxu0 %v1338
    %1956 = vmatpush1.bf16.xpose.msra.mxu0 %v1337
    %1957 = vmatprep.subr.bf16.mxu0 %v1344
    %1958 = vmatpush1.bf16.xpose.msra.mxu0 %v1343
    %1959 = vmatprep.subr.bf16.mxu0 %v1350
    %1960 = vmatpush1.bf16.xpose.msra.mxu0 %v1349
    %1961 = vmatprep.subr.bf16.mxu0 %v1356
    %1962 = vmatpush1.bf16.xpose.msra.mxu0 %v1355
    %1963 = vmatprep.subr.bf16.mxu0 %v1362
    %1964 = vmatpush1.bf16.xpose.msra.mxu0 %v1361
    %1965 = vmatprep.subr.bf16.mxu0 %v1368
    %1966 = vmatpush1.bf16.xpose.msra.mxu0 %v1367
    %1967 = vmatprep.subr.bf16.mxu0 %v1374
    %1968 = vmatpush1.bf16.xpose.msra.mxu0 %v1373
    %1969 = vmatprep.mubr.bf16.mxu0 %v408
    %1970 = vmatmul.mubr.bf16.gmra.mrb[0].mxu0 %v407
    %v1971 = vpop.f32.mrb[0].mxu0
    %v1972 = vadd.f32 %v1931, %v1971
    %v1973 = vpop.f32.mrb[0].mxu0
    %v1974 = vadd.f32 %v1933, %v1973
    %v1975 = vpop.f32.mrb[0].mxu0
    %v1976 = vpop.f32.mrb[0].mxu0
    %1977 = vdwg.mxu0
    %1978 = vmatprep.subr.bf16.mxu0 %v1376
    %1979 = vmatpush1.bf16.xpose.msra.mxu0 %v1375
    %1980 = vmatprep.subr.bf16.mxu0 %v1382
    %1981 = vmatpush1.bf16.xpose.msra.mxu0 %v1381
    %1982 = vmatprep.subr.bf16.mxu0 %v1388
    %1983 = vmatpush1.bf16.xpose.msra.mxu0 %v1387
    %1984 = vmatprep.subr.bf16.mxu0 %v1394
    %1985 = vmatpush1.bf16.xpose.msra.mxu0 %v1393
    %1986 = vmatprep.subr.bf16.mxu0 %v1400
    %1987 = vmatpush1.bf16.xpose.msra.mxu0 %v1399
    %1988 = vmatprep.subr.bf16.mxu0 %v1406
    %1989 = vmatpush1.bf16.xpose.msra.mxu0 %v1405
    %1990 = vmatprep.subr.bf16.mxu0 %v1412
    %1991 = vmatpush1.bf16.xpose.msra.mxu0 %v1411
    %1992 = vmatprep.subr.bf16.mxu0 %v1418
    %1993 = vmatpush1.bf16.xpose.msra.mxu0 %v1417
    %1994 = vmatprep.subr.bf16.mxu0 %v1424
    %1995 = vmatpush1.bf16.xpose.msra.mxu0 %v1423
    %1996 = vmatprep.subr.bf16.mxu0 %v1430
    %1997 = vmatpush1.bf16.xpose.msra.mxu0 %v1429
    %1998 = vmatprep.subr.bf16.mxu0 %v1436
    %1999 = vmatpush1.bf16.xpose.msra.mxu0 %v1435
    %2000 = vmatprep.subr.bf16.mxu0 %v1442
    %2001 = vmatpush1.bf16.xpose.msra.mxu0 %v1441
    %2002 = vmatprep.subr.bf16.mxu0 %v1448
    %2003 = vmatpush1.bf16.xpose.msra.mxu0 %v1447
    %2004 = vmatprep.subr.bf16.mxu0 %v1454
    %2005 = vmatpush1.bf16.xpose.msra.mxu0 %v1453
    %2006 = vmatprep.subr.bf16.mxu0 %v1460
    %2007 = vmatpush1.bf16.xpose.msra.mxu0 %v1459
    %2008 = vmatprep.subr.bf16.mxu0 %v1466
    %2009 = vmatpush1.bf16.xpose.msra.mxu0 %v1465
    %2010 = vmatprep.mubr.bf16.mxu0 %v404
    %2011 = vmatmul.mubr.bf16.gmra.mrb[0].mxu0 %v403
    %v2012 = vpop.f32.mrb[0].mxu0
    %v2013 = vadd.f32 %v375, %v2012
    %v2014 = vpop.f32.mrb[0].mxu0
    %v2015 = vadd.f32 %v379, %v2014
    %v2016 = vpop.f32.mrb[0].mxu0
    %v2017 = vpop.f32.mrb[0].mxu0
    %2018 = vdwg.mxu0
    %2019 = vmatprep.subr.bf16.mxu0 %v1378
    %2020 = vmatpush1.bf16.xpose.msra.mxu0 %v1377
    %2021 = vmatprep.subr.bf16.mxu0 %v1384
    %2022 = vmatpush1.bf16.xpose.msra.mxu0 %v1383
    %2023 = vmatprep.subr.bf16.mxu0 %v1390
    %2024 = vmatpush1.bf16.xpose.msra.mxu0 %v1389
    %2025 = vmatprep.subr.bf16.mxu0 %v1396
    %2026 = vmatpush1.bf16.xpose.msra.mxu0 %v1395
    %2027 = vmatprep.subr.bf16.mxu0 %v1402
    %2028 = vmatpush1.bf16.xpose.msra.mxu0 %v1401
    %2029 = vmatprep.subr.bf16.mxu0 %v1408
    %2030 = vmatpush1.bf16.xpose.msra.mxu0 %v1407
    %2031 = vmatprep.subr.bf16.mxu0 %v1414
    %2032 = vmatpush1.bf16.xpose.msra.mxu0 %v1413
    %2033 = vmatprep.subr.bf16.mxu0 %v1420
    %2034 = vmatpush1.bf16.xpose.msra.mxu0 %v1419
    %2035 = vmatprep.subr.bf16.mxu0 %v1426
    %2036 = vmatpush1.bf16.xpose.msra.mxu0 %v1425
    %2037 = vmatprep.subr.bf16.mxu0 %v1432
    %2038 = vmatpush1.bf16.xpose.msra.mxu0 %v1431
    %2039 = vmatprep.subr.bf16.mxu0 %v1438
    %2040 = vmatpush1.bf16.xpose.msra.mxu0 %v1437
    %2041 = vmatprep.subr.bf16.mxu0 %v1444
    %2042 = vmatpush1.bf16.xpose.msra.mxu0 %v1443
    %2043 = vmatprep.subr.bf16.mxu0 %v1450
    %2044 = vmatpush1.bf16.xpose.msra.mxu0 %v1449
    %2045 = vmatprep.subr.bf16.mxu0 %v1456
    %2046 = vmatpush1.bf16.xpose.msra.mxu0 %v1455
    %2047 = vmatprep.subr.bf16.mxu0 %v1462
    %2048 = vmatpush1.bf16.xpose.msra.mxu0 %v1461
    %2049 = vmatprep.subr.bf16.mxu0 %v1468
    %2050 = vmatpush1.bf16.xpose.msra.mxu0 %v1467
    %2051 = vmatprep.mubr.bf16.mxu0 %v406
    %2052 = vmatmul.mubr.bf16.gmra.mrb[0].mxu0 %v405
    %v2053 = vpop.f32.mrb[0].mxu0
    %v2054 = vadd.f32 %v2013, %v2053
    %v2055 = vpop.f32.mrb[0].mxu0
    %v2056 = vadd.f32 %v2015, %v2055
    %v2057 = vpop.f32.mrb[0].mxu0
    %v2058 = vpop.f32.mrb[0].mxu0
    %2059 = vdwg.mxu0
    %2060 = vmatprep.subr.bf16.mxu0 %v1380
    %2061 = vmatpush1.bf16.xpose.msra.mxu0 %v1379
    %2062 = vmatprep.subr.bf16.mxu0 %v1386
    %2063 = vmatpush1.bf16.xpose.msra.mxu0 %v1385
    %2064 = vmatprep.subr.bf16.mxu0 %v1392
    %2065 = vmatpush1.bf16.xpose.msra.mxu0 %v1391
    %2066 = vmatprep.subr.bf16.mxu0 %v1398
    %2067 = vmatpush1.bf16.xpose.msra.mxu0 %v1397
    %2068 = vmatprep.subr.bf16.mxu0 %v1404
    %2069 = vmatpush1.bf16.xpose.msra.mxu0 %v1403
    %2070 = vmatprep.subr.bf16.mxu0 %v1410
    %2071 = vmatpush1.bf16.xpose.msra.mxu0 %v1409
    %2072 = vmatprep.subr.bf16.mxu0 %v1416
    %2073 = vmatpush1.bf16.xpose.msra.mxu0 %v1415
    %2074 = vmatprep.subr.bf16.mxu0 %v1422
    %2075 = vmatpush1.bf16.xpose.msra.mxu0 %v1421
    %2076 = vmatprep.subr.bf16.mxu0 %v1428
    %2077 = vmatpush1.bf16.xpose.msra.mxu0 %v1427
    %2078 = vmatprep.subr.bf16.mxu0 %v1434
    %2079 = vmatpush1.bf16.xpose.msra.mxu0 %v1433
    %2080 = vmatprep.subr.bf16.mxu0 %v1440
    %2081 = vmatpush1.bf16.xpose.msra.mxu0 %v1439
    %2082 = vmatprep.subr.bf16.mxu0 %v1446
    %2083 = vmatpush1.bf16.xpose.msra.mxu0 %v1445
    %2084 = vmatprep.subr.bf16.mxu0 %v1452
    %2085 = vmatpush1.bf16.xpose.msra.mxu0 %v1451
    %2086 = vmatprep.subr.bf16.mxu0 %v1458
    %2087 = vmatpush1.bf16.xpose.msra.mxu0 %v1457
    %2088 = vmatprep.subr.bf16.mxu0 %v1464
    %2089 = vmatpush1.bf16.xpose.msra.mxu0 %v1463
    %2090 = vmatprep.subr.bf16.mxu0 %v1470
    %2091 = vmatpush1.bf16.xpose.msra.mxu0 %v1469
    %2092 = vmatprep.mubr.bf16.mxu0 %v408
    %2093 = vmatmul.mubr.bf16.gmra.mrb[0].mxu0 %v407
    %v2094 = vpop.f32.mrb[0].mxu0
    %v2095 = vadd.f32 %v2054, %v2094
    %v2096 = vpop.f32.mrb[0].mxu0
    %v2097 = vadd.f32 %v2056, %v2096
    %v2098 = vpop.f32.mrb[0].mxu0
    %v2099 = vpop.f32.mrb[0].mxu0
    %2100 = vdwg.mxu0
    %2101 = vmatprep.subr.bf16.mxu0 %v1472
    %2102 = vmatpush1.bf16.xpose.msra.mxu0 %v1471
    %2103 = vmatprep.subr.bf16.mxu0 %v1478
    %2104 = vmatpush1.bf16.xpose.msra.mxu0 %v1477
    %2105 = vmatprep.subr.bf16.mxu0 %v1484
    %2106 = vmatpush1.bf16.xpose.msra.mxu0 %v1483
    %2107 = vmatprep.subr.bf16.mxu0 %v1490
    %2108 = vmatpush1.bf16.xpose.msra.mxu0 %v1489
    %2109 = vmatprep.subr.bf16.mxu0 %v1496
    %2110 = vmatpush1.bf16.xpose.msra.mxu0 %v1495
    %2111 = vmatprep.subr.bf16.mxu0 %v1502
    %2112 = vmatpush1.bf16.xpose.msra.mxu0 %v1501
    %2113 = vmatprep.subr.bf16.mxu0 %v1508
    %2114 = vmatpush1.bf16.xpose.msra.mxu0 %v1507
    %2115 = vmatprep.subr.bf16.mxu0 %v1514
    %2116 = vmatpush1.bf16.xpose.msra.mxu0 %v1513
    %2117 = vmatprep.subr.bf16.mxu0 %v1520
    %2118 = vmatpush1.bf16.xpose.msra.mxu0 %v1519
    %2119 = vmatprep.subr.bf16.mxu0 %v1526
    %2120 = vmatpush1.bf16.xpose.msra.mxu0 %v1525
    %2121 = vmatprep.subr.bf16.mxu0 %v1532
    %2122 = vmatpush1.bf16.xpose.msra.mxu0 %v1531
    %2123 = vmatprep.subr.bf16.mxu0 %v1538
    %2124 = vmatpush1.bf16.xpose.msra.mxu0 %v1537
    %2125 = vmatprep.subr.bf16.mxu0 %v1544
    %2126 = vmatpush1.bf16.xpose.msra.mxu0 %v1543
    %2127 = vmatprep.subr.bf16.mxu0 %v1550
    %2128 = vmatpush1.bf16.xpose.msra.mxu0 %v1549
    %2129 = vmatprep.subr.bf16.mxu0 %v1556
    %2130 = vmatpush1.bf16.xpose.msra.mxu0 %v1555
    %2131 = vmatprep.subr.bf16.mxu0 %v1562
    %2132 = vmatpush1.bf16.xpose.msra.mxu0 %v1561
    %2133 = vmatprep.mubr.bf16.mxu0 %v404
    %2134 = vmatmul.mubr.bf16.gmra.mrb[0].mxu0 %v403
    %v2135 = vpop.f32.mrb[0].mxu0
    %v2136 = vadd.f32 %v383, %v2135
    %v2137 = vpop.f32.mrb[0].mxu0
    %v2138 = vadd.f32 %v387, %v2137
    %v2139 = vpop.f32.mrb[0].mxu0
    %v2140 = vpop.f32.mrb[0].mxu0
    %2141 = vdwg.mxu0
    %2142 = vmatprep.subr.bf16.mxu0 %v1474
    %2143 = vmatpush1.bf16.xpose.msra.mxu0 %v1473
    %2144 = vmatprep.subr.bf16.mxu0 %v1480
    %2145 = vmatpush1.bf16.xpose.msra.mxu0 %v1479
    %2146 = vmatprep.subr.bf16.mxu0 %v1486
    %2147 = vmatpush1.bf16.xpose.msra.mxu0 %v1485
    %2148 = vmatprep.subr.bf16.mxu0 %v1492
    %2149 = vmatpush1.bf16.xpose.msra.mxu0 %v1491
    %2150 = vmatprep.subr.bf16.mxu0 %v1498
    %2151 = vmatpush1.bf16.xpose.msra.mxu0 %v1497
    %2152 = vmatprep.subr.bf16.mxu0 %v1504
    %2153 = vmatpush1.bf16.xpose.msra.mxu0 %v1503
    %2154 = vmatprep.subr.bf16.mxu0 %v1510
    %2155 = vmatpush1.bf16.xpose.msra.mxu0 %v1509
    %2156 = vmatprep.subr.bf16.mxu0 %v1516
    %2157 = vmatpush1.bf16.xpose.msra.mxu0 %v1515
    %2158 = vmatprep.subr.bf16.mxu0 %v1522
    %2159 = vmatpush1.bf16.xpose.msra.mxu0 %v1521
    %2160 = vmatprep.subr.bf16.mxu0 %v1528
    %2161 = vmatpush1.bf16.xpose.msra.mxu0 %v1527
    %2162 = vmatprep.subr.bf16.mxu0 %v1534
    %2163 = vmatpush1.bf16.xpose.msra.mxu0 %v1533
    %2164 = vmatprep.subr.bf16.mxu0 %v1540
    %2165 = vmatpush1.bf16.xpose.msra.mxu0 %v1539
    %2166 = vmatprep.subr.bf16.mxu0 %v1546
    %2167 = vmatpush1.bf16.xpose.msra.mxu0 %v1545
    %2168 = vmatprep.subr.bf16.mxu0 %v1552
    %2169 = vmatpush1.bf16.xpose.msra.mxu0 %v1551
    %2170 = vmatprep.subr.bf16.mxu0 %v1558
    %2171 = vmatpush1.bf16.xpose.msra.mxu0 %v1557
    %2172 = vmatprep.subr.bf16.mxu0 %v1564
    %2173 = vmatpush1.bf16.xpose.msra.mxu0 %v1563
    %2174 = vmatprep.mubr.bf16.mxu0 %v406
    %2175 = vmatmul.mubr.bf16.gmra.mrb[0].mxu0 %v405
    %v2176 = vpop.f32.mrb[0].mxu0
    %v2177 = vadd.f32 %v2136, %v2176
    %v2178 = vpop.f32.mrb[0].mxu0
    %v2179 = vadd.f32 %v2138, %v2178
    %v2180 = vpop.f32.mrb[0].mxu0
    %v2181 = vpop.f32.mrb[0].mxu0
    %2182 = vdwg.mxu0
    %2183 = vmatprep.subr.bf16.mxu0 %v1476
    %2184 = vmatpush1.bf16.xpose.msra.mxu0 %v1475
    %2185 = vmatprep.subr.bf16.mxu0 %v1482
    %2186 = vmatpush1.bf16.xpose.msra.mxu0 %v1481
    %2187 = vmatprep.subr.bf16.mxu0 %v1488
    %2188 = vmatpush1.bf16.xpose.msra.mxu0 %v1487
    %2189 = vmatprep.subr.bf16.mxu0 %v1494
    %2190 = vmatpush1.bf16.xpose.msra.mxu0 %v1493
    %2191 = vmatprep.subr.bf16.mxu0 %v1500
    %2192 = vmatpush1.bf16.xpose.msra.mxu0 %v1499
    %2193 = vmatprep.subr.bf16.mxu0 %v1506
    %2194 = vmatpush1.bf16.xpose.msra.mxu0 %v1505
    %2195 = vmatprep.subr.bf16.mxu0 %v1512
    %2196 = vmatpush1.bf16.xpose.msra.mxu0 %v1511
    %2197 = vmatprep.subr.bf16.mxu0 %v1518
    %2198 = vmatpush1.bf16.xpose.msra.mxu0 %v1517
    %2199 = vmatprep.subr.bf16.mxu0 %v1524
    %2200 = vmatpush1.bf16.xpose.msra.mxu0 %v1523
    %2201 = vmatprep.subr.bf16.mxu0 %v1530
    %2202 = vmatpush1.bf16.xpose.msra.mxu0 %v1529
    %2203 = vmatprep.subr.bf16.mxu0 %v1536
    %2204 = vmatpush1.bf16.xpose.msra.mxu0 %v1535
    %2205 = vmatprep.subr.bf16.mxu0 %v1542
    %2206 = vmatpush1.bf16.xpose.msra.mxu0 %v1541
    %2207 = vmatprep.subr.bf16.mxu0 %v1548
    %2208 = vmatpush1.bf16.xpose.msra.mxu0 %v1547
    %2209 = vmatprep.subr.bf16.mxu0 %v1554
    %2210 = vmatpush1.bf16.xpose.msra.mxu0 %v1553
    %2211 = vmatprep.subr.bf16.mxu0 %v1560
    %2212 = vmatpush1.bf16.xpose.msra.mxu0 %v1559
    %2213 = vmatprep.subr.bf16.mxu0 %v1566
    %2214 = vmatpush1.bf16.xpose.msra.mxu0 %v1565
    %2215 = vmatprep.mubr.bf16.mxu0 %v408
    %2216 = vmatmul.mubr.bf16.gmra.mrb[0].mxu0 %v407
    %v2217 = vpop.f32.mrb[0].mxu0
    %v2218 = vadd.f32 %v2177, %v2217
    %v2219 = vpop.f32.mrb[0].mxu0
    %v2220 = vadd.f32 %v2179, %v2219
    %v2221 = vpop.f32.mrb[0].mxu0
    %v2222 = vpop.f32.mrb[0].mxu0
    %2223 = vdwg.mxu0
    %v2224 = vld [vmem:[%s3] sm:$0xf]
    %v2225 = vld [vmem:[#allocation8] sm:$0xff]
    %v2226 = vld [vmem:[#allocation8 + $0x8] sm:$0xf]
    %v2229 = vcombine.high %v2225, %v2225
    %v2231 = vunpack.c.l.s4 1983009808
    %v2232 = vunpack.c.0.s8 %v2231
    %v2233 = vlaneseq
    %v2234 = vshrl.u32 %v2233, 7
    %v2235 = vsub.s32 %v2232, %v2234
    %v2236 = vrot.slane %v2225, %v2235
    %v2238 = vunpack.c.l.s4 1983009808
    %v2239 = vunpack.c.0.s8 %v2238
    %v2240 = vlaneseq
    %v2241 = vshrl.u32 %v2240, 7
    %v2242 = vsub.s32 %v2239, %v2241
    %v2243 = vrot.slane %v2229, %v2242
    %v2244 = vcombine.high %v2236, %v2236
    %v2245 = vcombine.high %v2243, %v2243
    %v2247 = vunpack.c.l.s4 1983009808
    %v2248 = vunpack.c.0.s8 %v2247
    %v2249 = vlaneseq
    %v2250 = vshrl.u32 %v2249, 7
    %v2251 = vsub.s32 %v2248, %v2250
    %v2252 = vrot.slane %v2226, %v2251
    %v2253 = vcombine.high %v2252, %v2252
    %vm2254 = vcmask 31744
    %v2256 = vsel %vm2254, %v2224, 0
    %vm2258 = vcmask 1041408
    %v2260 = vsel %vm2258, %v2236, 0
    %v2263 = vsel %vm2258, %v2244, 0
    %v2266 = vsel %vm2258, %v2243, 0
    %v2269 = vsel %vm2258, %v2245, 0
    %v2272 = vsel %vm2258, %v2252, 0
    %v2275 = vsel %vm2258, %v2253, 0
    %2277 = vmatprep.subr.bf16.mxu0 %v2263
    %2278 = vmatpush1.bf16.msra.mxu0 %v2260
    %2279 = vmatprep.subr.bf16.mxu0 0
    %2280 = vmatpush1.bf16.msra.mxu0 0
    %2281 = vmatprep.subr.bf16.mxu0 0
    %2282 = vmatpush1.bf16.msra.mxu0 0
    %2283 = vmatprep.subr.bf16.mxu0 0
    %2284 = vmatpush1.bf16.msra.mxu0 0
    %2285 = vmatprep.subr.bf16.mxu0 0
    %2286 = vmatpush1.bf16.msra.mxu0 0
    %2287 = vmatprep.subr.bf16.mxu0 0
    %2288 = vmatpush1.bf16.msra.mxu0 0
    %2289 = vmatprep.subr.bf16.mxu0 0
    %2290 = vmatpush1.bf16.msra.mxu0 0
    %2291 = vmatprep.subr.bf16.mxu0 0
    %2292 = vmatpush1.bf16.msra.mxu0 0
    %2293 = vmatprep.subr.bf16.mxu0 0
    %2294 = vmatpush1.bf16.msra.mxu0 0
    %2295 = vmatprep.subr.bf16.mxu0 0
    %2296 = vmatpush1.bf16.msra.mxu0 0
    %2297 = vmatprep.subr.bf16.mxu0 0
    %2298 = vmatpush1.bf16.msra.mxu0 0
    %2299 = vmatprep.subr.bf16.mxu0 0
    %2300 = vmatpush1.bf16.msra.mxu0 0
    %2301 = vmatprep.subr.bf16.mxu0 0
    %2302 = vmatpush1.bf16.msra.mxu0 0
    %2303 = vmatprep.subr.bf16.mxu0 0
    %2304 = vmatpush1.bf16.msra.mxu0 0
    %2305 = vmatprep.subr.bf16.mxu0 0
    %2306 = vmatpush1.bf16.msra.mxu0 0
    %2307 = vmatprep.subr.bf16.mxu0 0
    %2308 = vmatpush1.bf16.msra.mxu0 0
    %2309 = vmatprep.mubr.bf16.mxu0 0
    %2310 = vmatmul.mubr.bf16.gmra.mrb[0].mxu0 %v2256
    %v2311 = vpop.f32.mrb[0].mxu0
    %v2312 = vadd.f32 0.0, %v2311
    %v2313 = vpop.f32.mrb[0].mxu0
    %v2314 = vadd.f32 0.0, %v2313
    %v2315 = vpop.f32.mrb[0].mxu0
    %v2316 = vpop.f32.mrb[0].mxu0
    %2317 = vdwg.mxu0
    %2318 = vmatprep.subr.bf16.mxu0 %v2269
    %2319 = vmatpush1.bf16.msra.mxu0 %v2266
    %2320 = vmatprep.subr.bf16.mxu0 0
    %2321 = vmatpush1.bf16.msra.mxu0 0
    %2322 = vmatprep.subr.bf16.mxu0 0
    %2323 = vmatpush1.bf16.msra.mxu0 0
    %2324 = vmatprep.subr.bf16.mxu0 0
    %2325 = vmatpush1.bf16.msra.mxu0 0
    %2326 = vmatprep.subr.bf16.mxu0 0
    %2327 = vmatpush1.bf16.msra.mxu0 0
    %2328 = vmatprep.subr.bf16.mxu0 0
    %2329 = vmatpush1.bf16.msra.mxu0 0
    %2330 = vmatprep.subr.bf16.mxu0 0
    %2331 = vmatpush1.bf16.msra.mxu0 0
    %2332 = vmatprep.subr.bf16.mxu0 0
    %2333 = vmatpush1.bf16.msra.mxu0 0
    %2334 = vmatprep.subr.bf16.mxu0 0
    %2335 = vmatpush1.bf16.msra.mxu0 0
    %2336 = vmatprep.subr.bf16.mxu0 0
    %2337 = vmatpush1.bf16.msra.mxu0 0
    %2338 = vmatprep.subr.bf16.mxu0 0
    %2339 = vmatpush1.bf16.msra.mxu0 0
    %2340 = vmatprep.subr.bf16.mxu0 0
    %2341 = vmatpush1.bf16.msra.mxu0 0
    %2342 = vmatprep.subr.bf16.mxu0 0
    %2343 = vmatpush1.bf16.msra.mxu0 0
    %2344 = vmatprep.subr.bf16.mxu0 0
    %2345 = vmatpush1.bf16.msra.mxu0 0
    %2346 = vmatprep.subr.bf16.mxu0 0
    %2347 = vmatpush1.bf16.msra.mxu0 0
    %2348 = vmatprep.subr.bf16.mxu0 0
    %2349 = vmatpush1.bf16.msra.mxu0 0
    %2350 = vmatprep.mubr.bf16.mxu0 0
    %2351 = vmatmul.mubr.bf16.gmra.mrb[0].mxu0 %v2256
    %v2352 = vpop.f32.mrb[0].mxu0
    %v2353 = vadd.f32 0.0, %v2352
    %v2354 = vpop.f32.mrb[0].mxu0
    %v2355 = vadd.f32 0.0, %v2354
    %v2356 = vpop.f32.mrb[0].mxu0
    %v2357 = vpop.f32.mrb[0].mxu0
    %2358 = vdwg.mxu0
    %2359 = vmatprep.subr.bf16.mxu0 %v2275
    %2360 = vmatpush1.bf16.msra.mxu0 %v2272
    %2361 = vmatprep.subr.bf16.mxu0 0
    %2362 = vmatpush1.bf16.msra.mxu0 0
    %2363 = vmatprep.subr.bf16.mxu0 0
    %2364 = vmatpush1.bf16.msra.mxu0 0
    %2365 = vmatprep.subr.bf16.mxu0 0
    %2366 = vmatpush1.bf16.msra.mxu0 0
    %2367 = vmatprep.subr.bf16.mxu0 0
    %2368 = vmatpush1.bf16.msra.mxu0 0
    %2369 = vmatprep.subr.bf16.mxu0 0
    %2370 = vmatpush1.bf16.msra.mxu0 0
    %2371 = vmatprep.subr.bf16.mxu0 0
    %2372 = vmatpush1.bf16.msra.mxu0 0
    %2373 = vmatprep.subr.bf16.mxu0 0
    %2374 = vmatpush1.bf16.msra.mxu0 0
    %2375 = vmatprep.subr.bf16.mxu0 0
    %2376 = vmatpush1.bf16.msra.mxu0 0
    %2377 = vmatprep.subr.bf16.mxu0 0
    %2378 = vmatpush1.bf16.msra.mxu0 0
    %2379 = vmatprep.subr.bf16.mxu0 0
    %2380 = vmatpush1.bf16.msra.mxu0 0
    %2381 = vmatprep.subr.bf16.mxu0 0
    %2382 = vmatpush1.bf16.msra.mxu0 0
    %2383 = vmatprep.subr.bf16.mxu0 0
    %2384 = vmatpush1.bf16.msra.mxu0 0
    %2385 = vmatprep.subr.bf16.mxu0 0
    %2386 = vmatpush1.bf16.msra.mxu0 0
    %2387 = vmatprep.subr.bf16.mxu0 0
    %2388 = vmatpush1.bf16.msra.mxu0 0
    %2389 = vmatprep.subr.bf16.mxu0 0
    %2390 = vmatpush1.bf16.msra.mxu0 0
    %2391 = vmatprep.mubr.bf16.mxu0 0
    %2392 = vmatmul.mubr.bf16.gmra.mrb[0].mxu0 %v2256
    %v2393 = vpop.f32.mrb[0].mxu0
    %v2394 = vadd.f32 0.0, %v2393
    %v2395 = vpop.f32.mrb[0].mxu0
    %v2396 = vadd.f32 0.0, %v2395
    %v2397 = vpop.f32.mrb[0].mxu0
    %v2398 = vpop.f32.mrb[0].mxu0
    %2399 = vdwg.mxu0
    %v2400 = vadd.f32 %v1972, %v2312
    %v2401 = vadd.f32 %v1974, %v2314
    %v2402 = vadd.f32 %v2095, %v2353
    %v2403 = vadd.f32 %v2097, %v2355
    %v2404 = vadd.f32 %v2218, %v2394
    %v2405 = vadd.f32 %v2220, %v2396
    %v2406 = vpack.c.bf16 %v2400, %v2400
    %v2407 = vpack.c.bf16 %v2401, %v2401
    %v2408 = vpack.c.bf16 %v2402, %v2402
    %v2409 = vpack.c.bf16 %v2403, %v2403
    %v2410 = vpack.c.bf16 %v2404, %v2404
    %v2411 = vpack.c.bf16 %v2405, %v2405
    %v2418 = vunpack.c.l.b16 %v2406
    %v2419 = vunpack.c.l.b16 %v2407
    %v2420 = vunpack.c.l.b16 %v2408
    %v2421 = vunpack.c.l.b16 %v2409
    %v2422 = vunpack.c.l.b16 %v2410
    %v2423 = vunpack.c.l.b16 %v2411
    %v2424 = vpack.c.b16 %v2419, %v2418
    %v2425 = vpack.c.b16 %v2421, %v2420
    %v2426 = vpack.c.b16 %v2423, %v2422
    %2430 = vst [vmem:[#allocation10] sm:$0xff] %v2424
    %2431 = vst [vmem:[#allocation10 + $0x8] sm:$0xff] %v2425
    %2432 = vst [vmem:[#allocation10 + $0x10] sm:$0xff] %v2426
    // Predicated region
    $region38: #{tpu_custom_call.1} parent=1 // pred_check
      _
    $region39: #{tpu_custom_call.1} parent=1 // pred_check_branch
      %2434 = sbr.rel (0) target = $region41
    $region40: #{tpu_custom_call.1} parent=1 // pred_region
      %s2436 = ssub.s32 384, 384
      %2437 = vsyncadd [#allocation4], %s2436
      %s2439 = sshll.u32 [#allocation10], 4
      %s2440 = int_to_ptr.vmem [resolvable:$true] %s2439
      %2442 = dma.vmem_to_hbm [thread:$0]  %s2440, 384, %s5, [#allocation4]
    $region41: #{tpu_custom_call.1} parent=1 // pred_fallthru
      _
    // Predicated region
    $region42: #{tpu_custom_call.1} parent=1 // pred_check
      _
    $region43: #{tpu_custom_call.1} parent=1 // pred_check_branch
      %2444 = sbr.rel (0) target = $region45
    $region44: #{tpu_custom_call.1} parent=1 // pred_region
      %2445 = dma.done [#allocation4], 384
    $region45: #{tpu_custom_call.1} parent=1 // pred_fallthru
      _
    %2446 = vsyncpa [#allocation3], 1
    %2447 = vsyncpa [#allocation6], 1
    %2448 = vsyncpa [#allocation9], 1
    %2449 = vsyncpa [#allocation4], 1

</llo_original>
